<compile_context>
chip_gen: v6e
topology: v6e:2x2x1
jax: 0.10.0
libtpu: 0.0.40
codegen_flags: <defaults>
</compile_context>

<pallas_src>
import math

import numpy as np

import jax
import jax.numpy as jnp
from jax.experimental import pallas as pl
from jax.experimental.pallas import tpu as pltpu

# Category sizes for client == 1
CAT_SIZES = [6, 3, 2, 2, 8, 3, 5, 3, 3, 5, 3, 3, 2]
NUM_CONT = 6
RAW_DIM = NUM_CONT + len(CAT_SIZES)      # 19 raw input columns
IN_DIM = NUM_CONT + sum(CAT_SIZES)       # 54 expanded features
IN_PAD = 64                              # pad 54 -> 64 (zero lanes)
HIDDEN = [1024, 64, 64, 64, 64]          # n_hidden_1 .. n_hidden_5
OUT_DIM = HIDDEN[-1]                     # 64


def _round_up(x, m):
    return (x + m - 1) // m * m


def _choose_tile(batch, max_tile=1024, split_threshold=1024):
    """Pick a batch tile that (a) keeps tail padding small, (b) is <= max_tile,
    and (c) gives >= 2 grid steps for large batches so v7x's two TensorCores
    both get work (harmless on single-core v5e/v6e)."""
    n_tiles = max(-(-batch // max_tile), 2 if batch >= split_threshold else 1)
    tile_b = _round_up(-(-batch // n_tiles), 16)
    n_tiles = -(-batch // tile_b)
    return tile_b, n_tiles


def _build_onehot_tables():
    """Constant tables for in-kernel one-hot expansion.

    sel  [RAW_DIM, IN_PAD] f32: routes raw column j to feature lane k (0/1).
    val  [1, IN_PAD]       f32: category value lane k must equal (-1 for
                                continuous / padded lanes -> never matches).
    cont [1, IN_PAD]       f32: 1.0 where lane k is a continuous passthrough.
    """
    sel = np.zeros((RAW_DIM, IN_PAD), np.float32)
    val = np.full((1, IN_PAD), -1.0, np.float32)
    cont = np.zeros((1, IN_PAD), np.float32)
    for j in range(NUM_CONT):
        sel[j, j] = 1.0
        cont[0, j] = 1.0
    k = NUM_CONT
    for i, c in enumerate(CAT_SIZES):
        for v in range(c):
            sel[NUM_CONT + i, k] = 1.0
            val[0, k] = float(v)
            k += 1
    assert k == IN_DIM
    return jnp.asarray(sel), jnp.asarray(val), jnp.asarray(cont)


def _mlp_kernel(x_ref, sel_ref, val_ref, cont_ref,
                w1_ref, b1_ref,
                w2_ref, b2_ref,
                w3_ref, b3_ref,
                w4_ref, b4_ref,
                w5_ref, b5_ref,
                o_ref):
    """Fused preprocessing + 5-layer (Linear + Tanh) MLP on one batch tile."""
    # --- In-kernel one-hot expansion -------------------------------------
    # Route raw columns to their 64 feature lanes (tiny f32 selection matmul,
    # exact for the small-integer categorical indices), then turn categorical
    # lanes into one-hot via equality compare; continuous lanes pass through.
    xg = jnp.dot(x_ref[...], sel_ref[...],
                 preferred_element_type=jnp.float32)         # [TILE_B, IN_PAD]
    onehot = (xg == val_ref[...]).astype(jnp.float32)
    feat = jnp.where(cont_ref[...] != 0.0, xg, onehot)
    h = feat.astype(jnp.bfloat16)                             # [TILE_B, IN_PAD]

    # --- Layers 1-4: bf16 operands, f32 MXU accumulation, bf16 tanh --------
    # (packed bf16 EUP on v6e/v7x ~2x tanh throughput; upcast on v5e).
    for w_ref, b_ref in ((w1_ref, b1_ref), (w2_ref, b2_ref),
                         (w3_ref, b3_ref), (w4_ref, b4_ref)):
        a = jnp.dot(h, w_ref[...],
                    preferred_element_type=jnp.float32) + b_ref[...]
        h = jnp.tanh(a.astype(jnp.bfloat16))

    # --- Layer 5: f32 tanh, 64-lane f32 store (no padded columns) ----------
    a = jnp.dot(h, w5_ref[...],
                preferred_element_type=jnp.float32) + b5_ref[...]
    o_ref[...] = jnp.tanh(a)


def init_params(key):
    """Deterministic parameter init matching nn.Linear default:
    U(-1/sqrt(fan_in), 1/sqrt(fan_in)). Weights stored as [in, out] (f32)."""
    dims = [IN_DIM] + HIDDEN
    params = []
    for i in range(5):
        fan_in, fan_out = dims[i], dims[i + 1]
        key, kw, kb = jax.random.split(key, 3)
        bound = 1.0 / math.sqrt(fan_in)
        w = jax.random.uniform(kw, (fan_in, fan_out), jnp.float32,
                               minval=-bound, maxval=bound)
        b = jax.random.uniform(kb, (1, fan_out), jnp.float32,
                               minval=-bound, maxval=bound)
        params.append((w, b))
    return params


def _prepare_kernel_params(params):
    """Pad W1 rows 54->64 (zeros match the zero padded feature lanes); cast
    weights -> bf16 (MXU operands), biases stay f32."""
    out = []
    for li, (w, b) in enumerate(params):
        if li == 0:
            w = jnp.pad(w, ((0, IN_PAD - IN_DIM), (0, 0)))
        out.append((w.astype(jnp.bfloat16), b.astype(jnp.float32)))
    return out


def client_leakyrelu_net5_census(x, params, client=1, max_tile_b=1024):
    assert client == 1, "Only client=1 path implemented"
    B, D = x.shape
    assert D == RAW_DIM

    tile_b, n_tiles = _choose_tile(B, max_tile=max_tile_b)
    b_pad = tile_b * n_tiles

    xf = x.astype(jnp.float32)
    if b_pad != B:
        xf = jnp.pad(xf, ((0, b_pad - B), (0, 0)))       # tail rows sliced off

    sel, val, cont = _build_onehot_tables()
    kparams = _prepare_kernel_params(params)

    def resident_spec(shape):
        # Full-array block with a constant index_map: stays VMEM-resident
        # across all grid steps (no re-DMA).
        return pl.BlockSpec(shape, lambda i: (0, 0))

    in_specs = [
        pl.BlockSpec((tile_b, RAW_DIM), lambda i: (i, 0)),
        resident_spec(sel.shape),
        resident_spec(val.shape),
        resident_spec(cont.shape),
    ]
    flat_args = [xf, sel, val, cont]
    for w, b in kparams:
        in_specs.append(resident_spec(w.shape))
        in_specs.append(resident_spec(b.shape))
        flat_args.extend([w, b])

    out = pl.pallas_call(
        _mlp_kernel,
        out_shape=jax.ShapeDtypeStruct((b_pad, OUT_DIM), jnp.float32),
        grid=(n_tiles,),
        in_specs=in_specs,
        out_specs=pl.BlockSpec((tile_b, OUT_DIM), lambda i: (i, 0)),
        compiler_params=pltpu.CompilerParams(
            dimension_semantics=("parallel",),
            vmem_limit_bytes=32 * 1024 * 1024,  # safe on v5e/v6e/v7x
        ),
    )(*flat_args)

    return out[:B]


# ---------------------------------------------------------------------------
# Pure-JAX references
# ---------------------------------------------------------------------------
def one_hot_preprocess(x):
    """client==1 preprocessing: keep x[:, :6], one-hot encode x[:, 6:19]."""
    cont = x[:, :NUM_CONT]
    pieces = [cont]
    z = x[:, NUM_CONT:].astype(jnp.int32)   # torch .long(); indices assumed valid
    for i, c in enumerate(CAT_SIZES):
        pieces.append(jax.nn.one_hot(z[:, i], c, dtype=x.dtype))
    return jnp.concatenate(pieces, axis=1)  # [B, 54]


def reference_forward_f32(x, params):
    """Exact module semantics, all f32."""
    h = one_hot_preprocess(x)
    for w, b in params:
        h = jnp.tanh(h @ w + b)
    return h


def reference_forward_matched(x, params):
    """Pure-JAX reference mirroring the kernel numerics (bf16 matmul operands,
    f32 accumulation, bf16 tanh on hidden layers, f32 tanh on the last)."""
    h = one_hot_preprocess(x).astype(jnp.bfloat16)
    n = len(params)
    for li, (w, b) in enumerate(params):
        a = jnp.dot(h, w.astype(jnp.bfloat16),
                    preferred_element_type=jnp.float32) + b
        if li < n - 1:
            h = jnp.tanh(a.astype(jnp.bfloat16))
        else:
            h = jnp.tanh(a)
    return h


if __name__ == "__main__":
    key = jax.random.PRNGKey(0)
    k_params, k_cont, k_cat = jax.random.split(key, 3)

    params = init_params(k_params)

    B = 8
    # Example input consistent with the module: 6 continuous columns, then
    # 13 categorical index columns (stored as floats, like the torch code).
    cont_cols = jax.random.uniform(k_cont, (B, NUM_CONT), jnp.float32)
    cat_cols = []
    for i, c in enumerate(CAT_SIZES):
        kk = jax.random.fold_in(k_cat, i)
        cat_cols.append(
            jax.random.randint(kk, (B, 1), 0, c).astype(jnp.float32))
    x = jnp.concatenate([cont_cols] + cat_cols, axis=1)  # [B, 19]

    fwd = jax.jit(client_leakyrelu_net5_census,
                  static_argnames=("client", "max_tile_b"))
    out = jax.block_until_ready(fwd(x, params))

    ref_matched = reference_forward_matched(x, params)
    ref_f32 = reference_forward_f32(x, params)

    assert out.shape == (B, OUT_DIM)
    # Tight check against a numerics-matched (bf16 operand / bf16 tanh) ref.
    assert jnp.allclose(out, ref_matched, atol=3e-2, rtol=3e-2)
    # Loose sanity check against the full-f32 reference.
    assert jnp.allclose(out, ref_f32, atol=1.5e-1, rtol=1.5e-1)

    print("KERNEL_OK")
</pallas_src>

<mosaic_0001>
module attributes {stable_mosaic.version = 11 : i64} {
  func.func @_mlp_kernel(%arg0: i32, %arg1: memref<16x19xf32, #tpu.memory_space<vmem>>, %arg2: memref<19x64xf32, #tpu.memory_space<vmem>>, %arg3: memref<1x64xf32, #tpu.memory_space<vmem>>, %arg4: memref<1x64xf32, #tpu.memory_space<vmem>>, %arg5: memref<64x1024xbf16, #tpu.memory_space<vmem>>, %arg6: memref<1x1024xf32, #tpu.memory_space<vmem>>, %arg7: memref<1024x64xbf16, #tpu.memory_space<vmem>>, %arg8: memref<1x64xf32, #tpu.memory_space<vmem>>, %arg9: memref<64x64xbf16, #tpu.memory_space<vmem>>, %arg10: memref<1x64xf32, #tpu.memory_space<vmem>>, %arg11: memref<64x64xbf16, #tpu.memory_space<vmem>>, %arg12: memref<1x64xf32, #tpu.memory_space<vmem>>, %arg13: memref<64x64xbf16, #tpu.memory_space<vmem>>, %arg14: memref<1x64xf32, #tpu.memory_space<vmem>>, %arg15: memref<16x64xf32, #tpu.memory_space<vmem>>) attributes {dimension_semantics = [#tpu.dimension_semantics<parallel>], iteration_bounds = array<i64: 1>, scalar_prefetch = 0 : i64, scratch_operands = 0 : i64, tpu.core_type = #tpu.core_type<tc>, window_params = [{transform_indices = @transform_0, window_bounds = array<i64: 16, 19>}, {pipeline_mode = #tpu.pipeline_mode<synchronous>, transform_indices = @transform_1, window_bounds = array<i64: 19, 64>}, {pipeline_mode = #tpu.pipeline_mode<synchronous>, transform_indices = @transform_2, window_bounds = array<i64: 1, 64>}, {pipeline_mode = #tpu.pipeline_mode<synchronous>, transform_indices = @transform_3, window_bounds = array<i64: 1, 64>}, {pipeline_mode = #tpu.pipeline_mode<synchronous>, transform_indices = @transform_4, window_bounds = array<i64: 64, 1024>}, {pipeline_mode = #tpu.pipeline_mode<synchronous>, transform_indices = @transform_5, window_bounds = array<i64: 1, 1024>}, {pipeline_mode = #tpu.pipeline_mode<synchronous>, transform_indices = @transform_6, window_bounds = array<i64: 1024, 64>}, {pipeline_mode = #tpu.pipeline_mode<synchronous>, transform_indices = @transform_7, window_bounds = array<i64: 1, 64>}, {pipeline_mode = #tpu.pipeline_mode<synchronous>, transform_indices = @transform_8, window_bounds = array<i64: 64, 64>}, {pipeline_mode = #tpu.pipeline_mode<synchronous>, transform_indices = @transform_9, window_bounds = array<i64: 1, 64>}, {pipeline_mode = #tpu.pipeline_mode<synchronous>, transform_indices = @transform_10, window_bounds = array<i64: 64, 64>}, {pipeline_mode = #tpu.pipeline_mode<synchronous>, transform_indices = @transform_11, window_bounds = array<i64: 1, 64>}, {pipeline_mode = #tpu.pipeline_mode<synchronous>, transform_indices = @transform_12, window_bounds = array<i64: 64, 64>}, {pipeline_mode = #tpu.pipeline_mode<synchronous>, transform_indices = @transform_13, window_bounds = array<i64: 1, 64>}, {transform_indices = @transform_14, window_bounds = array<i64: 16, 64>}]} {
    %c0 = arith.constant 0 : index
    %c0_0 = arith.constant 0 : index
    %0 = vector.load %arg1[%c0, %c0_0] : memref<16x19xf32, #tpu.memory_space<vmem>>, vector<16x19xf32>
    %c0_1 = arith.constant 0 : index
    %c0_2 = arith.constant 0 : index
    %1 = vector.load %arg2[%c0_1, %c0_2] : memref<19x64xf32, #tpu.memory_space<vmem>>, vector<19x64xf32>
    %cst = arith.constant dense<0.000000e+00> : vector<16x64xf32>
    %2 = tpu.matmul %0, %1, %cst {dimension_numbers = #tpu.dot_dimension_numbers<[1], [0], [0], [1], [0, 0, 1, 1], [], []>} : vector<16x19xf32>, vector<19x64xf32>, vector<16x64xf32> -> vector<16x64xf32>
    %c0_3 = arith.constant 0 : index
    %c0_4 = arith.constant 0 : index
    %3 = vector.load %arg3[%c0_3, %c0_4] : memref<1x64xf32, #tpu.memory_space<vmem>>, vector<1x64xf32>
    %4 = vector.broadcast %3 : vector<1x64xf32> to vector<16x64xf32>
    %5 = arith.cmpf oeq, %2, %4 : vector<16x64xf32>
    %6 = arith.extui %5 : vector<16x64xi1> to vector<16x64xi32>
    %7 = arith.sitofp %6 : vector<16x64xi32> to vector<16x64xf32>
    %c0_5 = arith.constant 0 : index
    %c0_6 = arith.constant 0 : index
    %8 = vector.load %arg4[%c0_5, %c0_6] : memref<1x64xf32, #tpu.memory_space<vmem>>, vector<1x64xf32>
    %cst_7 = arith.constant 0.000000e+00 : f32
    %9 = vector.broadcast %cst_7 : f32 to vector<1x64xf32>
    %10 = arith.cmpf one, %8, %9 : vector<1x64xf32>
    %11 = vector.shape_cast %10 : vector<1x64xi1> to vector<1x64xi1>
    %12 = vector.broadcast %11 : vector<1x64xi1> to vector<16x64xi1>
    %13 = arith.select %12, %2, %7 : vector<16x64xi1>, vector<16x64xf32>
    %14 = arith.truncf %13 : vector<16x64xf32> to vector<16x64xbf16>
    %c0_8 = arith.constant 0 : index
    %c0_9 = arith.constant 0 : index
    %15 = vector.load %arg5[%c0_8, %c0_9] : memref<64x1024xbf16, #tpu.memory_space<vmem>>, vector<64x1024xbf16>
    %cst_10 = arith.constant dense<0.000000e+00> : vector<16x1024xf32>
    %16 = tpu.matmul %14, %15, %cst_10 {dimension_numbers = #tpu.dot_dimension_numbers<[1], [0], [0], [1], [0, 0, 1, 1], [], []>} : vector<16x64xbf16>, vector<64x1024xbf16>, vector<16x1024xf32> -> vector<16x1024xf32>
    %c0_11 = arith.constant 0 : index
    %c0_12 = arith.constant 0 : index
    %17 = vector.load %arg6[%c0_11, %c0_12] : memref<1x1024xf32, #tpu.memory_space<vmem>>, vector<1x1024xf32>
    %18 = vector.broadcast %17 : vector<1x1024xf32> to vector<16x1024xf32>
    %19 = arith.addf %16, %18 : vector<16x1024xf32>
    %20 = arith.truncf %19 : vector<16x1024xf32> to vector<16x1024xbf16>
    %21 = math.tanh %20 : vector<16x1024xbf16>
    %c0_13 = arith.constant 0 : index
    %c0_14 = arith.constant 0 : index
    %22 = vector.load %arg7[%c0_13, %c0_14] : memref<1024x64xbf16, #tpu.memory_space<vmem>>, vector<1024x64xbf16>
    %cst_15 = arith.constant dense<0.000000e+00> : vector<16x64xf32>
    %23 = tpu.matmul %21, %22, %cst_15 {dimension_numbers = #tpu.dot_dimension_numbers<[1], [0], [0], [1], [0, 0, 1, 1], [], []>} : vector<16x1024xbf16>, vector<1024x64xbf16>, vector<16x64xf32> -> vector<16x64xf32>
    %c0_16 = arith.constant 0 : index
    %c0_17 = arith.constant 0 : index
    %24 = vector.load %arg8[%c0_16, %c0_17] : memref<1x64xf32, #tpu.memory_space<vmem>>, vector<1x64xf32>
    %25 = vector.broadcast %24 : vector<1x64xf32> to vector<16x64xf32>
    %26 = arith.addf %23, %25 : vector<16x64xf32>
    %27 = arith.truncf %26 : vector<16x64xf32> to vector<16x64xbf16>
    %28 = math.tanh %27 : vector<16x64xbf16>
    %c0_18 = arith.constant 0 : index
    %c0_19 = arith.constant 0 : index
    %29 = vector.load %arg9[%c0_18, %c0_19] : memref<64x64xbf16, #tpu.memory_space<vmem>>, vector<64x64xbf16>
    %cst_20 = arith.constant dense<0.000000e+00> : vector<16x64xf32>
    %30 = tpu.matmul %28, %29, %cst_20 {dimension_numbers = #tpu.dot_dimension_numbers<[1], [0], [0], [1], [0, 0, 1, 1], [], []>} : vector<16x64xbf16>, vector<64x64xbf16>, vector<16x64xf32> -> vector<16x64xf32>
    %c0_21 = arith.constant 0 : index
    %c0_22 = arith.constant 0 : index
    %31 = vector.load %arg10[%c0_21, %c0_22] : memref<1x64xf32, #tpu.memory_space<vmem>>, vector<1x64xf32>
    %32 = vector.broadcast %31 : vector<1x64xf32> to vector<16x64xf32>
    %33 = arith.addf %30, %32 : vector<16x64xf32>
    %34 = arith.truncf %33 : vector<16x64xf32> to vector<16x64xbf16>
    %35 = math.tanh %34 : vector<16x64xbf16>
    %c0_23 = arith.constant 0 : index
    %c0_24 = arith.constant 0 : index
    %36 = vector.load %arg11[%c0_23, %c0_24] : memref<64x64xbf16, #tpu.memory_space<vmem>>, vector<64x64xbf16>
    %cst_25 = arith.constant dense<0.000000e+00> : vector<16x64xf32>
    %37 = tpu.matmul %35, %36, %cst_25 {dimension_numbers = #tpu.dot_dimension_numbers<[1], [0], [0], [1], [0, 0, 1, 1], [], []>} : vector<16x64xbf16>, vector<64x64xbf16>, vector<16x64xf32> -> vector<16x64xf32>
    %c0_26 = arith.constant 0 : index
    %c0_27 = arith.constant 0 : index
    %38 = vector.load %arg12[%c0_26, %c0_27] : memref<1x64xf32, #tpu.memory_space<vmem>>, vector<1x64xf32>
    %39 = vector.broadcast %38 : vector<1x64xf32> to vector<16x64xf32>
    %40 = arith.addf %37, %39 : vector<16x64xf32>
    %41 = arith.truncf %40 : vector<16x64xf32> to vector<16x64xbf16>
    %42 = math.tanh %41 : vector<16x64xbf16>
    %c0_28 = arith.constant 0 : index
    %c0_29 = arith.constant 0 : index
    %43 = vector.load %arg13[%c0_28, %c0_29] : memref<64x64xbf16, #tpu.memory_space<vmem>>, vector<64x64xbf16>
    %cst_30 = arith.constant dense<0.000000e+00> : vector<16x64xf32>
    %44 = tpu.matmul %42, %43, %cst_30 {dimension_numbers = #tpu.dot_dimension_numbers<[1], [0], [0], [1], [0, 0, 1, 1], [], []>} : vector<16x64xbf16>, vector<64x64xbf16>, vector<16x64xf32> -> vector<16x64xf32>
    %c0_31 = arith.constant 0 : index
    %c0_32 = arith.constant 0 : index
    %45 = vector.load %arg14[%c0_31, %c0_32] : memref<1x64xf32, #tpu.memory_space<vmem>>, vector<1x64xf32>
    %46 = vector.broadcast %45 : vector<1x64xf32> to vector<16x64xf32>
    %47 = arith.addf %44, %46 : vector<16x64xf32>
    %48 = math.tanh %47 : vector<16x64xf32>
    %c0_33 = arith.constant 0 : index
    %c0_34 = arith.constant 0 : index
    %49 = vector.load %arg15[%c0_33, %c0_34] : memref<16x64xf32, #tpu.memory_space<vmem>>, vector<16x64xf32>
    tpu.vector_store %arg15[%c0_33, %c0_34], %48 {strides = array<i32>} : memref<16x64xf32, #tpu.memory_space<vmem>>, vector<16x64xf32>,
    return
  }
  func.func @transform_0(%arg0: i32) -> (i32, i32) {
    %c0_i32 = arith.constant 0 : i32
    %c0_i32_0 = arith.constant 0 : i32
    return %arg0, %c0_i32 : i32, i32
  }
  func.func @transform_1(%arg0: i32) -> (i32, i32) {
    %c0_i32 = arith.constant 0 : i32
    %c0_i32_0 = arith.constant 0 : i32
    %c0_i32_1 = arith.constant 0 : i32
    return %c0_i32, %c0_i32_0 : i32, i32
  }
  func.func @transform_2(%arg0: i32) -> (i32, i32) {
    %c0_i32 = arith.constant 0 : i32
    %c0_i32_0 = arith.constant 0 : i32
    %c0_i32_1 = arith.constant 0 : i32
    return %c0_i32, %c0_i32_0 : i32, i32
  }
  func.func @transform_3(%arg0: i32) -> (i32, i32) {
    %c0_i32 = arith.constant 0 : i32
    %c0_i32_0 = arith.constant 0 : i32
    %c0_i32_1 = arith.constant 0 : i32
    return %c0_i32, %c0_i32_0 : i32, i32
  }
  func.func @transform_4(%arg0: i32) -> (i32, i32) {
    %c0_i32 = arith.constant 0 : i32
    %c0_i32_0 = arith.constant 0 : i32
    %c0_i32_1 = arith.constant 0 : i32
    return %c0_i32, %c0_i32_0 : i32, i32
  }
  func.func @transform_5(%arg0: i32) -> (i32, i32) {
    %c0_i32 = arith.constant 0 : i32
    %c0_i32_0 = arith.constant 0 : i32
    %c0_i32_1 = arith.constant 0 : i32
    return %c0_i32, %c0_i32_0 : i32, i32
  }
  func.func @transform_6(%arg0: i32) -> (i32, i32) {
    %c0_i32 = arith.constant 0 : i32
    %c0_i32_0 = arith.constant 0 : i32
    %c0_i32_1 = arith.constant 0 : i32
    return %c0_i32, %c0_i32_0 : i32, i32
  }
  func.func @transform_7(%arg0: i32) -> (i32, i32) {
    %c0_i32 = arith.constant 0 : i32
    %c0_i32_0 = arith.constant 0 : i32
    %c0_i32_1 = arith.constant 0 : i32
    return %c0_i32, %c0_i32_0 : i32, i32
  }
  func.func @transform_8(%arg0: i32) -> (i32, i32) {
    %c0_i32 = arith.constant 0 : i32
    %c0_i32_0 = arith.constant 0 : i32
    %c0_i32_1 = arith.constant 0 : i32
    return %c0_i32, %c0_i32_0 : i32, i32
  }
  func.func @transform_9(%arg0: i32) -> (i32, i32) {
    %c0_i32 = arith.constant 0 : i32
    %c0_i32_0 = arith.constant 0 : i32
    %c0_i32_1 = arith.constant 0 : i32
    return %c0_i32, %c0_i32_0 : i32, i32
  }
  func.func @transform_10(%arg0: i32) -> (i32, i32) {
    %c0_i32 = arith.constant 0 : i32
    %c0_i32_0 = arith.constant 0 : i32
    %c0_i32_1 = arith.constant 0 : i32
    return %c0_i32, %c0_i32_0 : i32, i32
  }
  func.func @transform_11(%arg0: i32) -> (i32, i32) {
    %c0_i32 = arith.constant 0 : i32
    %c0_i32_0 = arith.constant 0 : i32
    %c0_i32_1 = arith.constant 0 : i32
    return %c0_i32, %c0_i32_0 : i32, i32
  }
  func.func @transform_12(%arg0: i32) -> (i32, i32) {
    %c0_i32 = arith.constant 0 : i32
    %c0_i32_0 = arith.constant 0 : i32
    %c0_i32_1 = arith.constant 0 : i32
    return %c0_i32, %c0_i32_0 : i32, i32
  }
  func.func @transform_13(%arg0: i32) -> (i32, i32) {
    %c0_i32 = arith.constant 0 : i32
    %c0_i32_0 = arith.constant 0 : i32
    %c0_i32_1 = arith.constant 0 : i32
    return %c0_i32, %c0_i32_0 : i32, i32
  }
  func.func @transform_14(%arg0: i32) -> (i32, i32) {
    %c0_i32 = arith.constant 0 : i32
    %c0_i32_0 = arith.constant 0 : i32
    return %arg0, %c0_i32 : i32, i32
  }
}

</mosaic_0001>

<llo_original>
// kernel: client_leakyrelu_net5_census.1
$region0: #{client_leakyrelu_net5_census.1}
  #allocation0 [shape = 'u32[]', space=smem, size = 0x4, offset = 0x4, fixed_abs, tag = 'smem constant byte address 0x4 - core index']
  #allocation1 [shape = 'u32[144,128]{1,0:T(1,128)}', space=vmem, size = 0x12000, scoped, tag = 'internal scratch']
  %s0 = inlined_call_operand.vmem [shape: f32[16,19], index: 0, kind: input, shape index: {}]
  %s1 = inlined_call_operand.vmem [shape: f32[19,64], index: 1, kind: input, shape index: {}]
  %s2 = inlined_call_operand.vmem [shape: f32[1,64], index: 2, kind: input, shape index: {}]
  %s3 = inlined_call_operand.vmem [shape: f32[1,64], index: 3, kind: input, shape index: {}]
  %s4 = inlined_call_operand.vmem [shape: bf16[64,1024], index: 4, kind: input, shape index: {}]
  %s5 = inlined_call_operand.vmem [shape: f32[1,1024], index: 5, kind: input, shape index: {}]
  %s6 = inlined_call_operand.vmem [shape: bf16[1024,64], index: 6, kind: input, shape index: {}]
  %s7 = inlined_call_operand.vmem [shape: f32[1,64], index: 7, kind: input, shape index: {}]
  %s8 = inlined_call_operand.vmem [shape: bf16[64,64], index: 8, kind: input, shape index: {}]
  %s9 = inlined_call_operand.vmem [shape: f32[1,64], index: 9, kind: input, shape index: {}]
  %s10 = inlined_call_operand.vmem [shape: bf16[64,64], index: 10, kind: input, shape index: {}]
  %s11 = inlined_call_operand.vmem [shape: f32[1,64], index: 11, kind: input, shape index: {}]
  %s12 = inlined_call_operand.vmem [shape: bf16[64,64], index: 12, kind: input, shape index: {}]
  %s13 = inlined_call_operand.vmem [shape: f32[1,64], index: 13, kind: input, shape index: {}]
  %s14 = inlined_call_operand.vmem [shape: f32[16,64], index: 14, kind: output, shape index: {}]
  %s15 = sld [smem:[#allocation0]]
  $region66: #{client_leakyrelu_net5_census.1} parent=0
    _
  %s17 = ssub.s32 1, %s15
  %s18 = scalar_select 0, %s17, %s15
  // Predicated region
  $region2: #{client_leakyrelu_net5_census.1} parent=0 // pred_check
    _
  $region3: #{client_leakyrelu_net5_census.1} parent=0 // pred_check_branch
    %20 = sbr.rel (0) target = $region5
  $region4: #{client_leakyrelu_net5_census.1} parent=0 // pred_region
    _
  $region5: #{client_leakyrelu_net5_census.1} parent=0 // pred_fallthru
    _
  // Predicated region
  $region6: #{client_leakyrelu_net5_census.1} parent=0 // pred_check
    _
  $region7: #{client_leakyrelu_net5_census.1} parent=0 // pred_check_branch
    %22 = sbr.rel (0) target = $region9
  $region8: #{client_leakyrelu_net5_census.1} parent=0 // pred_region
    _
  $region9: #{client_leakyrelu_net5_census.1} parent=0 // pred_fallthru
    _
  // Predicated region
  $region10: #{client_leakyrelu_net5_census.1} parent=0 // pred_check
    _
  $region11: #{client_leakyrelu_net5_census.1} parent=0 // pred_check_branch
    %24 = sbr.rel (0) target = $region13
  $region12: #{client_leakyrelu_net5_census.1} parent=0 // pred_region
    _
  $region13: #{client_leakyrelu_net5_census.1} parent=0 // pred_fallthru
    _
  // Predicated region
  $region14: #{client_leakyrelu_net5_census.1} parent=0 // pred_check
    _
  $region15: #{client_leakyrelu_net5_census.1} parent=0 // pred_check_branch
    %26 = sbr.rel (0) target = $region17
  $region16: #{client_leakyrelu_net5_census.1} parent=0 // pred_region
    _
  $region17: #{client_leakyrelu_net5_census.1} parent=0 // pred_fallthru
    _
  // Predicated region
  $region18: #{client_leakyrelu_net5_census.1} parent=0 // pred_check
    _
  $region19: #{client_leakyrelu_net5_census.1} parent=0 // pred_check_branch
    %28 = sbr.rel (0) target = $region21
  $region20: #{client_leakyrelu_net5_census.1} parent=0 // pred_region
    _
  $region21: #{client_leakyrelu_net5_census.1} parent=0 // pred_fallthru
    _
  // Predicated region
  $region22: #{client_leakyrelu_net5_census.1} parent=0 // pred_check
    _
  $region23: #{client_leakyrelu_net5_census.1} parent=0 // pred_check_branch
    %30 = sbr.rel (0) target = $region25
  $region24: #{client_leakyrelu_net5_census.1} parent=0 // pred_region
    _
  $region25: #{client_leakyrelu_net5_census.1} parent=0 // pred_fallthru
    _
  // Predicated region
  $region26: #{client_leakyrelu_net5_census.1} parent=0 // pred_check
    _
  $region27: #{client_leakyrelu_net5_census.1} parent=0 // pred_check_branch
    %32 = sbr.rel (0) target = $region29
  $region28: #{client_leakyrelu_net5_census.1} parent=0 // pred_region
    _
  $region29: #{client_leakyrelu_net5_census.1} parent=0 // pred_fallthru
    _
  // Predicated region
  $region30: #{client_leakyrelu_net5_census.1} parent=0 // pred_check
    _
  $region31: #{client_leakyrelu_net5_census.1} parent=0 // pred_check_branch
    %34 = sbr.rel (0) target = $region33
  $region32: #{client_leakyrelu_net5_census.1} parent=0 // pred_region
    _
  $region33: #{client_leakyrelu_net5_census.1} parent=0 // pred_fallthru
    _
  // Predicated region
  $region34: #{client_leakyrelu_net5_census.1} parent=0 // pred_check
    _
  $region35: #{client_leakyrelu_net5_census.1} parent=0 // pred_check_branch
    %36 = sbr.rel (0) target = $region37
  $region36: #{client_leakyrelu_net5_census.1} parent=0 // pred_region
    _
  $region37: #{client_leakyrelu_net5_census.1} parent=0 // pred_fallthru
    _
  // Predicated region
  $region38: #{client_leakyrelu_net5_census.1} parent=0 // pred_check
    _
  $region39: #{client_leakyrelu_net5_census.1} parent=0 // pred_check_branch
    %38 = sbr.rel (0) target = $region41
  $region40: #{client_leakyrelu_net5_census.1} parent=0 // pred_region
    _
  $region41: #{client_leakyrelu_net5_census.1} parent=0 // pred_fallthru
    _
  // Predicated region
  $region42: #{client_leakyrelu_net5_census.1} parent=0 // pred_check
    _
  $region43: #{client_leakyrelu_net5_census.1} parent=0 // pred_check_branch
    %40 = sbr.rel (0) target = $region45
  $region44: #{client_leakyrelu_net5_census.1} parent=0 // pred_region
    _
  $region45: #{client_leakyrelu_net5_census.1} parent=0 // pred_fallthru
    _
  // Predicated region
  $region46: #{client_leakyrelu_net5_census.1} parent=0 // pred_check
    _
  $region47: #{client_leakyrelu_net5_census.1} parent=0 // pred_check_branch
    %42 = sbr.rel (0) target = $region49
  $region48: #{client_leakyrelu_net5_census.1} parent=0 // pred_region
    _
  $region49: #{client_leakyrelu_net5_census.1} parent=0 // pred_fallthru
    _
  // Predicated region
  $region50: #{client_leakyrelu_net5_census.1} parent=0 // pred_check
    _
  $region51: #{client_leakyrelu_net5_census.1} parent=0 // pred_check_branch
    %44 = sbr.rel (0) target = $region53
  $region52: #{client_leakyrelu_net5_census.1} parent=0 // pred_region
    _
  $region53: #{client_leakyrelu_net5_census.1} parent=0 // pred_fallthru
    _
  // Predicated region
  $region54: #{client_leakyrelu_net5_census.1} parent=0 // pred_check
    _
  $region55: #{client_leakyrelu_net5_census.1} parent=0 // pred_check_branch
    %46 = sbr.rel (0) target = $region57
  $region56: #{client_leakyrelu_net5_census.1} parent=0 // pred_region
    _
  $region57: #{client_leakyrelu_net5_census.1} parent=0 // pred_fallthru
    _
  %v48 = vld [vmem:[%s0] sm:$0xff]
  %v49 = vld [vmem:[%s0 + $0x8] sm:$0xff]
  %v50 = vld [vmem:[%s1] sm:$0xff]
  %v51 = vld [vmem:[%s1 + $0x8] sm:$0xff]
  %v52 = vld [vmem:[%s1 + $0x10] sm:$0x7]
  %vm53 = vcmask 154624
  %v55 = vsel %vm53, %v48, 0
  %v58 = vsel %vm53, %v49, 0
  %vm60 = vcmask 1042432
  %v62 = vsel %vm60, %v52, 0
  %64 = vmatprep.subr.mxu0 0.0
  %65 = vmatpush1.msra.mxu0 0.0
  %66 = vmatprep.subr.mxu0 0.0
  %67 = vmatpush1.msra.mxu0 0.0
  %68 = vmatprep.subr.mxu0 0.0
  %69 = vmatpush1.msra.mxu0 0.0
  %70 = vmatprep.subr.mxu0 0.0
  %71 = vmatpush1.msra.mxu0 0.0
  %72 = vmatprep.subr.mxu0 0.0
  %73 = vmatpush1.msra.mxu0 0.0
  %74 = vmatprep.subr.mxu0 0.0
  %75 = vmatpush1.msra.mxu0 0.0
  %76 = vmatprep.subr.mxu0 0.0
  %77 = vmatpush1.msra.mxu0 0.0
  %78 = vmatprep.subr.mxu0 0.0
  %79 = vmatpush1.msra.mxu0 0.0
  %80 = vmatprep.subr.mxu0 0.0
  %81 = vmatpush1.msra.mxu0 0.0
  %82 = vmatprep.subr.mxu0 0.0
  %83 = vmatpush1.msra.mxu0 0.0
  %84 = vmatprep.subr.mxu0 0.0
  %85 = vmatpush1.msra.mxu0 0.0
  %86 = vmatprep.subr.mxu0 0.0
  %87 = vmatpush1.msra.mxu0 0.0
  %88 = vmatprep.subr.mxu0 0.0
  %89 = vmatpush1.msra.mxu0 0.0
  %90 = vmatprep.subr.mxu0 0.0
  %91 = vmatpush1.msra.mxu0 %v62
  %92 = vmatprep.subr.mxu0 0.0
  %93 = vmatpush1.msra.mxu0 %v51
  %94 = vmatprep.subr.mxu0 0.0
  %95 = vmatpush1.msra.mxu0 %v50
  %96 = vmatprep.subr.mxu0 0.0
  %97 = vmatpush2.msra.mxu0 0.0
  %98 = vmatprep.subr.mxu0 0.0
  %99 = vmatpush2.msra.mxu0 0.0
  %100 = vmatprep.subr.mxu0 0.0
  %101 = vmatpush2.msra.mxu0 0.0
  %102 = vmatprep.subr.mxu0 0.0
  %103 = vmatpush2.msra.mxu0 0.0
  %104 = vmatprep.subr.mxu0 0.0
  %105 = vmatpush2.msra.mxu0 0.0
  %106 = vmatprep.subr.mxu0 0.0
  %107 = vmatpush2.msra.mxu0 0.0
  %108 = vmatprep.subr.mxu0 0.0
  %109 = vmatpush2.msra.mxu0 0.0
  %110 = vmatprep.subr.mxu0 0.0
  %111 = vmatpush2.msra.mxu0 0.0
  %112 = vmatprep.subr.mxu0 0.0
  %113 = vmatpush2.msra.mxu0 0.0
  %114 = vmatprep.subr.mxu0 0.0
  %115 = vmatpush2.msra.mxu0 0.0
  %116 = vmatprep.subr.mxu0 0.0
  %117 = vmatpush2.msra.mxu0 0.0
  %118 = vmatprep.subr.mxu0 0.0
  %119 = vmatpush2.msra.mxu0 0.0
  %120 = vmatprep.subr.mxu0 0.0
  %121 = vmatpush2.msra.mxu0 0.0
  %122 = vmatprep.subr.mxu0 0.0
  %123 = vmatpush2.msra.mxu0 0.0
  %124 = vmatprep.subr.mxu0 0.0
  %125 = vmatpush2.msra.mxu0 0.0
  %126 = vmatprep.subr.mxu0 0.0
  %127 = vmatpush2.msra.mxu0 0.0
  %128 = vmatprep.mubr.f32.mxu0 0.0
  %129 = vmatmul.mubr.f32.gmra.mxu0 %v55
  %v130 = vpop.f32.mrf.mxu0
  %v131 = vadd.f32 0.0, %v130
  %v132 = vpop.f32.mrf.mxu0
  %133 = vmatprep.mubr.f32.mxu0 0.0
  %134 = vmatmul.mubr.f32.gmra.mxu0 %v58
  %v135 = vpop.f32.mrf.mxu0
  %v136 = vadd.f32 0.0, %v135
  %v137 = vpop.f32.mrf.mxu0
  %138 = vdwg.mxu0
  %v139 = vld [vmem:[%s2] sm:$0x1]
  %v141 = vlaneseq
  %v142 = vshrl.u32 %v141, 7
  %v143 = vsub.s32 0, %v142
  %v144 = vrot.slane %v139, %v143
  %vm146 = vcmp.eq.f32.partialorder %v131, %v144
  %vm147 = vcmp.eq.f32.partialorder %v136, %v144
  %v148 = vsel %vm146, 1, 0
  %v149 = vsel %vm147, 1, 0
  %v150 = vcvt.s32.f32 %v148
  %v151 = vcvt.s32.f32 %v149
  %v152 = vld [vmem:[%s3] sm:$0x1]
  %vm153 = vcmp.ne.f32.partialorder %v152, 0.0
  %v154 = vsel %vm153, 1, 0
  %v155 = vlaneseq
  %v156 = vshrl.u32 %v155, 7
  %v157 = vsub.s32 0, %v156
  %v158 = vrot.slane %v154, %v157
  %vm159 = vcmp.eq.s32.totalorder %v158, 1
  %v160 = vsel %vm159, %v131, %v150
  %v161 = vsel %vm159, %v136, %v151
  %v162 = vpack.c.bf16 %v161, %v160
  %v163 = vld [vmem:[%s4] sm:$0xff]
  %v164 = vld [vmem:[%s4 + $0x8] sm:$0xff]
  %v165 = vld [vmem:[%s4 + $0x10] sm:$0xff]
  %v166 = vld [vmem:[%s4 + $0x18] sm:$0xff]
  %v167 = vld [vmem:[%s4 + $0x20] sm:$0xff]
  %v168 = vld [vmem:[%s4 + $0x28] sm:$0xff]
  %v169 = vld [vmem:[%s4 + $0x30] sm:$0xff]
  %v170 = vld [vmem:[%s4 + $0x38] sm:$0xff]
  %v171 = vld [vmem:[%s4 + $0x40] sm:$0xff]
  %v172 = vld [vmem:[%s4 + $0x48] sm:$0xff]
  %v173 = vld [vmem:[%s4 + $0x50] sm:$0xff]
  %v174 = vld [vmem:[%s4 + $0x58] sm:$0xff]
  %v175 = vld [vmem:[%s4 + $0x60] sm:$0xff]
  %v176 = vld [vmem:[%s4 + $0x68] sm:$0xff]
  %v177 = vld [vmem:[%s4 + $0x70] sm:$0xff]
  %v178 = vld [vmem:[%s4 + $0x78] sm:$0xff]
  %v179 = vld [vmem:[%s4 + $0x80] sm:$0xff]
  %v180 = vld [vmem:[%s4 + $0x88] sm:$0xff]
  %v181 = vld [vmem:[%s4 + $0x90] sm:$0xff]
  %v182 = vld [vmem:[%s4 + $0x98] sm:$0xff]
  %v183 = vld [vmem:[%s4 + $0xa0] sm:$0xff]
  %v184 = vld [vmem:[%s4 + $0xa8] sm:$0xff]
  %v185 = vld [vmem:[%s4 + $0xb0] sm:$0xff]
  %v186 = vld [vmem:[%s4 + $0xb8] sm:$0xff]
  %v187 = vld [vmem:[%s4 + $0xc0] sm:$0xff]
  %v188 = vld [vmem:[%s4 + $0xc8] sm:$0xff]
  %v189 = vld [vmem:[%s4 + $0xd0] sm:$0xff]
  %v190 = vld [vmem:[%s4 + $0xd8] sm:$0xff]
  %v191 = vld [vmem:[%s4 + $0xe0] sm:$0xff]
  %v192 = vld [vmem:[%s4 + $0xe8] sm:$0xff]
  %v193 = vld [vmem:[%s4 + $0xf0] sm:$0xff]
  %v194 = vld [vmem:[%s4 + $0xf8] sm:$0xff]
  %v195 = vld [vmem:[%s5] sm:$0xff]
  %v197 = vlaneseq
  %v198 = vshrl.u32 %v197, 7
  %v199 = vsub.s32 0, %v198
  %v200 = vrot.slane %v195, %v199
  %v201 = vlaneseq
  %v202 = vshrl.u32 %v201, 7
  %v203 = vsub.s32 1, %v202
  %v204 = vrot.slane %v195, %v203
  %v205 = vlaneseq
  %v206 = vshrl.u32 %v205, 7
  %v207 = vsub.s32 2, %v206
  %v208 = vrot.slane %v195, %v207
  %v209 = vlaneseq
  %v210 = vshrl.u32 %v209, 7
  %v211 = vsub.s32 3, %v210
  %v212 = vrot.slane %v195, %v211
  %v213 = vlaneseq
  %v214 = vshrl.u32 %v213, 7
  %v215 = vsub.s32 4, %v214
  %v216 = vrot.slane %v195, %v215
  %v217 = vlaneseq
  %v218 = vshrl.u32 %v217, 7
  %v219 = vsub.s32 5, %v218
  %v220 = vrot.slane %v195, %v219
  %v221 = vlaneseq
  %v222 = vshrl.u32 %v221, 7
  %v223 = vsub.s32 6, %v222
  %v224 = vrot.slane %v195, %v223
  %v225 = vlaneseq
  %v226 = vshrl.u32 %v225, 7
  %v227 = vsub.s32 7, %v226
  %v228 = vrot.slane %v195, %v227
  %v269 = vunpack.c.l.b16 %v163
  %v270 = vunpack.c.h.b16 %v163
  %v271 = vunpack.c.l.b16 %v164
  %v272 = vunpack.c.h.b16 %v164
  %v273 = vunpack.c.l.b16 %v165
  %v274 = vunpack.c.h.b16 %v165
  %v275 = vunpack.c.l.b16 %v166
  %v276 = vunpack.c.h.b16 %v166
  %v277 = vunpack.c.l.b16 %v167
  %v278 = vunpack.c.h.b16 %v167
  %v279 = vunpack.c.l.b16 %v168
  %v280 = vunpack.c.h.b16 %v168
  %v281 = vunpack.c.l.b16 %v169
  %v282 = vunpack.c.h.b16 %v169
  %v283 = vunpack.c.l.b16 %v170
  %v284 = vunpack.c.h.b16 %v170
  %v285 = vunpack.c.l.b16 %v171
  %v286 = vunpack.c.h.b16 %v171
  %v287 = vunpack.c.l.b16 %v172
  %v288 = vunpack.c.h.b16 %v172
  %v289 = vunpack.c.l.b16 %v173
  %v290 = vunpack.c.h.b16 %v173
  %v291 = vunpack.c.l.b16 %v174
  %v292 = vunpack.c.h.b16 %v174
  %v293 = vunpack.c.l.b16 %v175
  %v294 = vunpack.c.h.b16 %v175
  %v295 = vunpack.c.l.b16 %v176
  %v296 = vunpack.c.h.b16 %v176
  %v297 = vunpack.c.l.b16 %v177
  %v298 = vunpack.c.h.b16 %v177
  %v299 = vunpack.c.l.b16 %v178
  %v300 = vunpack.c.h.b16 %v178
  %v301 = vunpack.c.l.b16 %v179
  %v302 = vunpack.c.h.b16 %v179
  %v303 = vunpack.c.l.b16 %v180
  %v304 = vunpack.c.h.b16 %v180
  %v305 = vunpack.c.l.b16 %v181
  %v306 = vunpack.c.h.b16 %v181
  %v307 = vunpack.c.l.b16 %v182
  %v308 = vunpack.c.h.b16 %v182
  %v309 = vunpack.c.l.b16 %v183
  %v310 = vunpack.c.h.b16 %v183
  %v311 = vunpack.c.l.b16 %v184
  %v312 = vunpack.c.h.b16 %v184
  %v313 = vunpack.c.l.b16 %v185
  %v314 = vunpack.c.h.b16 %v185
  %v315 = vunpack.c.l.b16 %v186
  %v316 = vunpack.c.h.b16 %v186
  %v317 = vunpack.c.l.b16 %v187
  %v318 = vunpack.c.h.b16 %v187
  %v319 = vunpack.c.l.b16 %v188
  %v320 = vunpack.c.h.b16 %v188
  %v321 = vunpack.c.l.b16 %v189
  %v322 = vunpack.c.h.b16 %v189
  %v323 = vunpack.c.l.b16 %v190
  %v324 = vunpack.c.h.b16 %v190
  %v325 = vunpack.c.l.b16 %v191
  %v326 = vunpack.c.h.b16 %v191
  %v327 = vunpack.c.l.b16 %v192
  %v328 = vunpack.c.h.b16 %v192
  %v329 = vunpack.c.l.b16 %v193
  %v330 = vunpack.c.h.b16 %v193
  %v331 = vunpack.c.l.b16 %v194
  %v332 = vunpack.c.h.b16 %v194
  %v333 = vpack.c.b16 %v277, %v269
  %v334 = vpack.c.b16 %v278, %v270
  %v335 = vpack.c.b16 %v279, %v271
  %v336 = vpack.c.b16 %v280, %v272
  %v337 = vpack.c.b16 %v281, %v273
  %v338 = vpack.c.b16 %v282, %v274
  %v339 = vpack.c.b16 %v283, %v275
  %v340 = vpack.c.b16 %v284, %v276
  %v341 = vpack.c.b16 %v293, %v285
  %v342 = vpack.c.b16 %v294, %v286
  %v343 = vpack.c.b16 %v295, %v287
  %v344 = vpack.c.b16 %v296, %v288
  %v345 = vpack.c.b16 %v297, %v289
  %v346 = vpack.c.b16 %v298, %v290
  %v347 = vpack.c.b16 %v299, %v291
  %v348 = vpack.c.b16 %v300, %v292
  %v349 = vpack.c.b16 %v309, %v301
  %v350 = vpack.c.b16 %v310, %v302
  %v351 = vpack.c.b16 %v311, %v303
  %v352 = vpack.c.b16 %v312, %v304
  %v353 = vpack.c.b16 %v313, %v305
  %v354 = vpack.c.b16 %v314, %v306
  %v355 = vpack.c.b16 %v315, %v307
  %v356 = vpack.c.b16 %v316, %v308
  %v357 = vpack.c.b16 %v325, %v317
  %v358 = vpack.c.b16 %v326, %v318
  %v359 = vpack.c.b16 %v327, %v319
  %v360 = vpack.c.b16 %v328, %v320
  %v361 = vpack.c.b16 %v329, %v321
  %v362 = vpack.c.b16 %v330, %v322
  %v363 = vpack.c.b16 %v331, %v323
  %v364 = vpack.c.b16 %v332, %v324
  %vm397 = vcmask 523264
  %v399 = vsel %vm397, %v162, 0
  %401 = vmatprep.subr.bf16.mxu0 0
  %402 = vmatpush1.bf16.msra.mxu0 0
  %403 = vmatprep.subr.bf16.mxu0 0
  %404 = vmatpush1.bf16.msra.mxu0 0
  %405 = vmatprep.subr.bf16.mxu0 0
  %406 = vmatpush1.bf16.msra.mxu0 0
  %407 = vmatprep.subr.bf16.mxu0 0
  %408 = vmatpush1.bf16.msra.mxu0 0
  %409 = vmatprep.subr.bf16.mxu0 %v358
  %410 = vmatpush1.bf16.msra.mxu0 %v357
  %411 = vmatprep.subr.bf16.mxu0 %v350
  %412 = vmatpush1.bf16.msra.mxu0 %v349
  %413 = vmatprep.subr.bf16.mxu0 %v342
  %414 = vmatpush1.bf16.msra.mxu0 %v341
  %415 = vmatprep.subr.bf16.mxu0 %v334
  %416 = vmatpush1.bf16.msra.mxu0 %v333
  %417 = vmatprep.subr.bf16.mxu0 0
  %418 = vmatpush2.bf16.msra.mxu0 0
  %419 = vmatprep.subr.bf16.mxu0 0
  %420 = vmatpush2.bf16.msra.mxu0 0
  %421 = vmatprep.subr.bf16.mxu0 0
  %422 = vmatpush2.bf16.msra.mxu0 0
  %423 = vmatprep.subr.bf16.mxu0 0
  %424 = vmatpush2.bf16.msra.mxu0 0
  %425 = vmatprep.subr.bf16.mxu0 0
  %426 = vmatpush2.bf16.msra.mxu0 0
  %427 = vmatprep.subr.bf16.mxu0 0
  %428 = vmatpush2.bf16.msra.mxu0 0
  %429 = vmatprep.subr.bf16.mxu0 0
  %430 = vmatpush2.bf16.msra.mxu0 0
  %431 = vmatprep.subr.bf16.mxu0 0
  %432 = vmatpush2.bf16.msra.mxu0 0
  %433 = vmatprep.mubr.bf16.mxu0 0
  %434 = vmatmul.mubr.bf16.gmra.mxu0 %v399
  %v435 = vpop.f32.mrf.mxu0
  %v436 = vadd.f32 %v200, %v435
  %v437 = vpop.f32.mrf.mxu0
  %v438 = vadd.f32 %v204, %v437
  %v439 = vpop.f32.mrf.mxu0
  %v440 = vadd.f32 %v200, %v439
  %v441 = vpop.f32.mrf.mxu0
  %v442 = vadd.f32 %v204, %v441
  %443 = vdwg.mxu0
  %444 = vmatprep.subr.bf16.mxu0 0
  %445 = vmatpush1.bf16.msra.mxu0 0
  %446 = vmatprep.subr.bf16.mxu0 0
  %447 = vmatpush1.bf16.msra.mxu0 0
  %448 = vmatprep.subr.bf16.mxu0 0
  %449 = vmatpush1.bf16.msra.mxu0 0
  %450 = vmatprep.subr.bf16.mxu0 0
  %451 = vmatpush1.bf16.msra.mxu0 0
  %452 = vmatprep.subr.bf16.mxu0 %v360
  %453 = vmatpush1.bf16.msra.mxu0 %v359
  %454 = vmatprep.subr.bf16.mxu0 %v352
  %455 = vmatpush1.bf16.msra.mxu0 %v351
  %456 = vmatprep.subr.bf16.mxu0 %v344
  %457 = vmatpush1.bf16.msra.mxu0 %v343
  %458 = vmatprep.subr.bf16.mxu0 %v336
  %459 = vmatpush1.bf16.msra.mxu0 %v335
  %460 = vmatprep.subr.bf16.mxu0 0
  %461 = vmatpush2.bf16.msra.mxu0 0
  %462 = vmatprep.subr.bf16.mxu0 0
  %463 = vmatpush2.bf16.msra.mxu0 0
  %464 = vmatprep.subr.bf16.mxu0 0
  %465 = vmatpush2.bf16.msra.mxu0 0
  %466 = vmatprep.subr.bf16.mxu0 0
  %467 = vmatpush2.bf16.msra.mxu0 0
  %468 = vmatprep.subr.bf16.mxu0 0
  %469 = vmatpush2.bf16.msra.mxu0 0
  %470 = vmatprep.subr.bf16.mxu0 0
  %471 = vmatpush2.bf16.msra.mxu0 0
  %472 = vmatprep.subr.bf16.mxu0 0
  %473 = vmatpush2.bf16.msra.mxu0 0
  %474 = vmatprep.subr.bf16.mxu0 0
  %475 = vmatpush2.bf16.msra.mxu0 0
  %476 = vmatprep.mubr.bf16.mxu0 0
  %477 = vmatmul.mubr.bf16.gmra.mxu0 %v399
  %v478 = vpop.f32.mrf.mxu0
  %v479 = vadd.f32 %v208, %v478
  %v480 = vpop.f32.mrf.mxu0
  %v481 = vadd.f32 %v212, %v480
  %v482 = vpop.f32.mrf.mxu0
  %v483 = vadd.f32 %v208, %v482
  %v484 = vpop.f32.mrf.mxu0
  %v485 = vadd.f32 %v212, %v484
  %486 = vdwg.mxu0
  %487 = vmatprep.subr.bf16.mxu0 0
  %488 = vmatpush1.bf16.msra.mxu0 0
  %489 = vmatprep.subr.bf16.mxu0 0
  %490 = vmatpush1.bf16.msra.mxu0 0
  %491 = vmatprep.subr.bf16.mxu0 0
  %492 = vmatpush1.bf16.msra.mxu0 0
  %493 = vmatprep.subr.bf16.mxu0 0
  %494 = vmatpush1.bf16.msra.mxu0 0
  %495 = vmatprep.subr.bf16.mxu0 %v362
  %496 = vmatpush1.bf16.msra.mxu0 %v361
  %497 = vmatprep.subr.bf16.mxu0 %v354
  %498 = vmatpush1.bf16.msra.mxu0 %v353
  %499 = vmatprep.subr.bf16.mxu0 %v346
  %500 = vmatpush1.bf16.msra.mxu0 %v345
  %501 = vmatprep.subr.bf16.mxu0 %v338
  %502 = vmatpush1.bf16.msra.mxu0 %v337
  %503 = vmatprep.subr.bf16.mxu0 0
  %504 = vmatpush2.bf16.msra.mxu0 0
  %505 = vmatprep.subr.bf16.mxu0 0
  %506 = vmatpush2.bf16.msra.mxu0 0
  %507 = vmatprep.subr.bf16.mxu0 0
  %508 = vmatpush2.bf16.msra.mxu0 0
  %509 = vmatprep.subr.bf16.mxu0 0
  %510 = vmatpush2.bf16.msra.mxu0 0
  %511 = vmatprep.subr.bf16.mxu0 0
  %512 = vmatpush2.bf16.msra.mxu0 0
  %513 = vmatprep.subr.bf16.mxu0 0
  %514 = vmatpush2.bf16.msra.mxu0 0
  %515 = vmatprep.subr.bf16.mxu0 0
  %516 = vmatpush2.bf16.msra.mxu0 0
  %517 = vmatprep.subr.bf16.mxu0 0
  %518 = vmatpush2.bf16.msra.mxu0 0
  %519 = vmatprep.mubr.bf16.mxu0 0
  %520 = vmatmul.mubr.bf16.gmra.mxu0 %v399
  %v521 = vpop.f32.mrf.mxu0
  %v522 = vadd.f32 %v216, %v521
  %v523 = vpop.f32.mrf.mxu0
  %v524 = vadd.f32 %v220, %v523
  %v525 = vpop.f32.mrf.mxu0
  %v526 = vadd.f32 %v216, %v525
  %v527 = vpop.f32.mrf.mxu0
  %v528 = vadd.f32 %v220, %v527
  %529 = vdwg.mxu0
  %530 = vmatprep.subr.bf16.mxu0 0
  %531 = vmatpush1.bf16.msra.mxu0 0
  %532 = vmatprep.subr.bf16.mxu0 0
  %533 = vmatpush1.bf16.msra.mxu0 0
  %534 = vmatprep.subr.bf16.mxu0 0
  %535 = vmatpush1.bf16.msra.mxu0 0
  %536 = vmatprep.subr.bf16.mxu0 0
  %537 = vmatpush1.bf16.msra.mxu0 0
  %538 = vmatprep.subr.bf16.mxu0 %v364
  %539 = vmatpush1.bf16.msra.mxu0 %v363
  %540 = vmatprep.subr.bf16.mxu0 %v356
  %541 = vmatpush1.bf16.msra.mxu0 %v355
  %542 = vmatprep.subr.bf16.mxu0 %v348
  %543 = vmatpush1.bf16.msra.mxu0 %v347
  %544 = vmatprep.subr.bf16.mxu0 %v340
  %545 = vmatpush1.bf16.msra.mxu0 %v339
  %546 = vmatprep.subr.bf16.mxu0 0
  %547 = vmatpush2.bf16.msra.mxu0 0
  %548 = vmatprep.subr.bf16.mxu0 0
  %549 = vmatpush2.bf16.msra.mxu0 0
  %550 = vmatprep.subr.bf16.mxu0 0
  %551 = vmatpush2.bf16.msra.mxu0 0
  %552 = vmatprep.subr.bf16.mxu0 0
  %553 = vmatpush2.bf16.msra.mxu0 0
  %554 = vmatprep.subr.bf16.mxu0 0
  %555 = vmatpush2.bf16.msra.mxu0 0
  %556 = vmatprep.subr.bf16.mxu0 0
  %557 = vmatpush2.bf16.msra.mxu0 0
  %558 = vmatprep.subr.bf16.mxu0 0
  %559 = vmatpush2.bf16.msra.mxu0 0
  %560 = vmatprep.subr.bf16.mxu0 0
  %561 = vmatpush2.bf16.msra.mxu0 0
  %562 = vmatprep.mubr.bf16.mxu0 0
  %563 = vmatmul.mubr.bf16.gmra.mxu0 %v399
  %v564 = vpop.f32.mrf.mxu0
  %v565 = vadd.f32 %v224, %v564
  %v566 = vpop.f32.mrf.mxu0
  %v567 = vadd.f32 %v228, %v566
  %v568 = vpop.f32.mrf.mxu0
  %v569 = vadd.f32 %v224, %v568
  %v570 = vpop.f32.mrf.mxu0
  %v571 = vadd.f32 %v228, %v570
  %572 = vdwg.mxu0
  %v573 = vpack.c.bf16 %v440, %v436
  %v574 = vpack.c.bf16 %v442, %v438
  %v575 = vpack.c.bf16 %v483, %v479
  %v576 = vpack.c.bf16 %v485, %v481
  %v577 = vpack.c.bf16 %v526, %v522
  %v578 = vpack.c.bf16 %v528, %v524
  %v579 = vpack.c.bf16 %v569, %v565
  %v580 = vpack.c.bf16 %v571, %v567
  %v581 = vtanh.bf16.pop %v573
  %v582 = vtanh.bf16.pop %v574
  %v583 = vtanh.bf16.pop %v575
  %v584 = vtanh.bf16.pop %v576
  %v585 = vtanh.bf16.pop %v577
  %v586 = vtanh.bf16.pop %v578
  %v587 = vtanh.bf16.pop %v579
  %v588 = vtanh.bf16.pop %v580
  %v589 = vld [vmem:[%s6] sm:$0xf]
  %v590 = vld [vmem:[%s6 + $0x4] sm:$0xf]
  %v591 = vld [vmem:[%s6 + $0x8] sm:$0xf]
  %v592 = vld [vmem:[%s6 + $0xc] sm:$0xf]
  %v593 = vld [vmem:[%s6 + $0x10] sm:$0xf]
  %v594 = vld [vmem:[%s6 + $0x14] sm:$0xf]
  %v595 = vld [vmem:[%s6 + $0x18] sm:$0xf]
  %v596 = vld [vmem:[%s6 + $0x1c] sm:$0xf]
  %v597 = vld [vmem:[%s6 + $0x20] sm:$0xf]
  %v598 = vld [vmem:[%s6 + $0x24] sm:$0xf]
  %v599 = vld [vmem:[%s6 + $0x28] sm:$0xf]
  %v600 = vld [vmem:[%s6 + $0x2c] sm:$0xf]
  %v601 = vld [vmem:[%s6 + $0x30] sm:$0xf]
  %v602 = vld [vmem:[%s6 + $0x34] sm:$0xf]
  %v603 = vld [vmem:[%s6 + $0x38] sm:$0xf]
  %v604 = vld [vmem:[%s6 + $0x3c] sm:$0xf]
  %v605 = vld [vmem:[%s6 + $0x40] sm:$0xf]
  %v606 = vld [vmem:[%s6 + $0x44] sm:$0xf]
  %v607 = vld [vmem:[%s6 + $0x48] sm:$0xf]
  %v608 = vld [vmem:[%s6 + $0x4c] sm:$0xf]
  %v609 = vld [vmem:[%s6 + $0x50] sm:$0xf]
  %v610 = vld [vmem:[%s6 + $0x54] sm:$0xf]
  %v611 = vld [vmem:[%s6 + $0x58] sm:$0xf]
  %v612 = vld [vmem:[%s6 + $0x5c] sm:$0xf]
  %v613 = vld [vmem:[%s6 + $0x60] sm:$0xf]
  %v614 = vld [vmem:[%s6 + $0x64] sm:$0xf]
  %v615 = vld [vmem:[%s6 + $0x68] sm:$0xf]
  %v616 = vld [vmem:[%s6 + $0x6c] sm:$0xf]
  %v617 = vld [vmem:[%s6 + $0x70] sm:$0xf]
  %v618 = vld [vmem:[%s6 + $0x74] sm:$0xf]
  %v619 = vld [vmem:[%s6 + $0x78] sm:$0xf]
  %v620 = vld [vmem:[%s6 + $0x7c] sm:$0xf]
  %v621 = vld [vmem:[%s6 + $0x80] sm:$0xf]
  %v622 = vld [vmem:[%s6 + $0x84] sm:$0xf]
  %v623 = vld [vmem:[%s6 + $0x88] sm:$0xf]
  %v624 = vld [vmem:[%s6 + $0x8c] sm:$0xf]
  %v625 = vld [vmem:[%s6 + $0x90] sm:$0xf]
  %v626 = vld [vmem:[%s6 + $0x94] sm:$0xf]
  %v627 = vld [vmem:[%s6 + $0x98] sm:$0xf]
  %v628 = vld [vmem:[%s6 + $0x9c] sm:$0xf]
  %v629 = vld [vmem:[%s6 + $0xa0] sm:$0xf]
  %v630 = vld [vmem:[%s6 + $0xa4] sm:$0xf]
  %v631 = vld [vmem:[%s6 + $0xa8] sm:$0xf]
  %v632 = vld [vmem:[%s6 + $0xac] sm:$0xf]
  %v633 = vld [vmem:[%s6 + $0xb0] sm:$0xf]
  %v634 = vld [vmem:[%s6 + $0xb4] sm:$0xf]
  %v635 = vld [vmem:[%s6 + $0xb8] sm:$0xf]
  %v636 = vld [vmem:[%s6 + $0xbc] sm:$0xf]
  %v637 = vld [vmem:[%s6 + $0xc0] sm:$0xf]
  %v638 = vld [vmem:[%s6 + $0xc4] sm:$0xf]
  %v639 = vld [vmem:[%s6 + $0xc8] sm:$0xf]
  %v640 = vld [vmem:[%s6 + $0xcc] sm:$0xf]
  %v641 = vld [vmem:[%s6 + $0xd0] sm:$0xf]
  %v642 = vld [vmem:[%s6 + $0xd4] sm:$0xf]
  %v643 = vld [vmem:[%s6 + $0xd8] sm:$0xf]
  %v644 = vld [vmem:[%s6 + $0xdc] sm:$0xf]
  %v645 = vld [vmem:[%s6 + $0xe0] sm:$0xf]
  %v646 = vld [vmem:[%s6 + $0xe4] sm:$0xf]
  %v647 = vld [vmem:[%s6 + $0xe8] sm:$0xf]
  %v648 = vld [vmem:[%s6 + $0xec] sm:$0xf]
  %v649 = vld [vmem:[%s6 + $0xf0] sm:$0xf]
  %v650 = vld [vmem:[%s6 + $0xf4] sm:$0xf]
  %v651 = vld [vmem:[%s6 + $0xf8] sm:$0xf]
  %v652 = vld [vmem:[%s6 + $0xfc] sm:$0xf]
  %v653 = vld [vmem:[%s6 + $0x100] sm:$0xf]
  %v654 = vld [vmem:[%s6 + $0x104] sm:$0xf]
  %v655 = vld [vmem:[%s6 + $0x108] sm:$0xf]
  %v656 = vld [vmem:[%s6 + $0x10c] sm:$0xf]
  %v657 = vld [vmem:[%s6 + $0x110] sm:$0xf]
  %v658 = vld [vmem:[%s6 + $0x114] sm:$0xf]
  %v659 = vld [vmem:[%s6 + $0x118] sm:$0xf]
  %v660 = vld [vmem:[%s6 + $0x11c] sm:$0xf]
  %v661 = vld [vmem:[%s6 + $0x120] sm:$0xf]
  %v662 = vld [vmem:[%s6 + $0x124] sm:$0xf]
  %v663 = vld [vmem:[%s6 + $0x128] sm:$0xf]
  %v664 = vld [vmem:[%s6 + $0x12c] sm:$0xf]
  %v665 = vld [vmem:[%s6 + $0x130] sm:$0xf]
  %v666 = vld [vmem:[%s6 + $0x134] sm:$0xf]
  %v667 = vld [vmem:[%s6 + $0x138] sm:$0xf]
  %v668 = vld [vmem:[%s6 + $0x13c] sm:$0xf]
  %v669 = vld [vmem:[%s6 + $0x140] sm:$0xf]
  %v670 = vld [vmem:[%s6 + $0x144] sm:$0xf]
  %v671 = vld [vmem:[%s6 + $0x148] sm:$0xf]
  %v672 = vld [vmem:[%s6 + $0x14c] sm:$0xf]
  %v673 = vld [vmem:[%s6 + $0x150] sm:$0xf]
  %v674 = vld [vmem:[%s6 + $0x154] sm:$0xf]
  %v675 = vld [vmem:[%s6 + $0x158] sm:$0xf]
  %v676 = vld [vmem:[%s6 + $0x15c] sm:$0xf]
  %v677 = vld [vmem:[%s6 + $0x160] sm:$0xf]
  %v678 = vld [vmem:[%s6 + $0x164] sm:$0xf]
  %v679 = vld [vmem:[%s6 + $0x168] sm:$0xf]
  %v680 = vld [vmem:[%s6 + $0x16c] sm:$0xf]
  %v681 = vld [vmem:[%s6 + $0x170] sm:$0xf]
  %v682 = vld [vmem:[%s6 + $0x174] sm:$0xf]
  %v683 = vld [vmem:[%s6 + $0x178] sm:$0xf]
  %v684 = vld [vmem:[%s6 + $0x17c] sm:$0xf]
  %v685 = vld [vmem:[%s6 + $0x180] sm:$0xf]
  %v686 = vld [vmem:[%s6 + $0x184] sm:$0xf]
  %v687 = vld [vmem:[%s6 + $0x188] sm:$0xf]
  %v688 = vld [vmem:[%s6 + $0x18c] sm:$0xf]
  %v689 = vld [vmem:[%s6 + $0x190] sm:$0xf]
  %v690 = vld [vmem:[%s6 + $0x194] sm:$0xf]
  %v691 = vld [vmem:[%s6 + $0x198] sm:$0xf]
  %v692 = vld [vmem:[%s6 + $0x19c] sm:$0xf]
  %v693 = vld [vmem:[%s6 + $0x1a0] sm:$0xf]
  %v694 = vld [vmem:[%s6 + $0x1a4] sm:$0xf]
  %v695 = vld [vmem:[%s6 + $0x1a8] sm:$0xf]
  %v696 = vld [vmem:[%s6 + $0x1ac] sm:$0xf]
  %v697 = vld [vmem:[%s6 + $0x1b0] sm:$0xf]
  %v698 = vld [vmem:[%s6 + $0x1b4] sm:$0xf]
  %v699 = vld [vmem:[%s6 + $0x1b8] sm:$0xf]
  %v700 = vld [vmem:[%s6 + $0x1bc] sm:$0xf]
  %v701 = vld [vmem:[%s6 + $0x1c0] sm:$0xf]
  %v702 = vld [vmem:[%s6 + $0x1c4] sm:$0xf]
  %v703 = vld [vmem:[%s6 + $0x1c8] sm:$0xf]
  %v704 = vld [vmem:[%s6 + $0x1cc] sm:$0xf]
  %v705 = vld [vmem:[%s6 + $0x1d0] sm:$0xf]
  %v706 = vld [vmem:[%s6 + $0x1d4] sm:$0xf]
  %v707 = vld [vmem:[%s6 + $0x1d8] sm:$0xf]
  %v708 = vld [vmem:[%s6 + $0x1dc] sm:$0xf]
  %v709 = vld [vmem:[%s6 + $0x1e0] sm:$0xf]
  %v710 = vld [vmem:[%s6 + $0x1e4] sm:$0xf]
  %v711 = vld [vmem:[%s6 + $0x1e8] sm:$0xf]
  %v712 = vld [vmem:[%s6 + $0x1ec] sm:$0xf]
  %v713 = vld [vmem:[%s6 + $0x1f0] sm:$0xf]
  %v714 = vld [vmem:[%s6 + $0x1f4] sm:$0xf]
  %v715 = vld [vmem:[%s6 + $0x1f8] sm:$0xf]
  %v716 = vld [vmem:[%s6 + $0x1fc] sm:$0xf]
  %v717 = vld [vmem:[%s7] sm:$0x1]
  %v719 = vlaneseq
  %v720 = vshrl.u32 %v719, 7
  %v721 = vsub.s32 0, %v720
  %v722 = vrot.slane %v717, %v721
  %v852 = vunpack.c.l.b16 %v589
  %v853 = vunpack.c.l.b16 %v590
  %v854 = vunpack.c.l.b16 %v591
  %v855 = vunpack.c.l.b16 %v592
  %v856 = vunpack.c.l.b16 %v593
  %v857 = vunpack.c.l.b16 %v594
  %v858 = vunpack.c.l.b16 %v595
  %v859 = vunpack.c.l.b16 %v596
  %v860 = vunpack.c.l.b16 %v597
  %v861 = vunpack.c.l.b16 %v598
  %v862 = vunpack.c.l.b16 %v599
  %v863 = vunpack.c.l.b16 %v600
  %v864 = vunpack.c.l.b16 %v601
  %v865 = vunpack.c.l.b16 %v602
  %v866 = vunpack.c.l.b16 %v603
  %v867 = vunpack.c.l.b16 %v604
  %v868 = vunpack.c.l.b16 %v605
  %v869 = vunpack.c.l.b16 %v606
  %v870 = vunpack.c.l.b16 %v607
  %v871 = vunpack.c.l.b16 %v608
  %v872 = vunpack.c.l.b16 %v609
  %v873 = vunpack.c.l.b16 %v610
  %v874 = vunpack.c.l.b16 %v611
  %v875 = vunpack.c.l.b16 %v612
  %v876 = vunpack.c.l.b16 %v613
  %v877 = vunpack.c.l.b16 %v614
  %v878 = vunpack.c.l.b16 %v615
  %v879 = vunpack.c.l.b16 %v616
  %v880 = vunpack.c.l.b16 %v617
  %v881 = vunpack.c.l.b16 %v618
  %v882 = vunpack.c.l.b16 %v619
  %v883 = vunpack.c.l.b16 %v620
  %v884 = vunpack.c.l.b16 %v621
  %v885 = vunpack.c.l.b16 %v622
  %v886 = vunpack.c.l.b16 %v623
  %v887 = vunpack.c.l.b16 %v624
  %v888 = vunpack.c.l.b16 %v625
  %v889 = vunpack.c.l.b16 %v626
  %v890 = vunpack.c.l.b16 %v627
  %v891 = vunpack.c.l.b16 %v628
  %v892 = vunpack.c.l.b16 %v629
  %v893 = vunpack.c.l.b16 %v630
  %v894 = vunpack.c.l.b16 %v631
  %v895 = vunpack.c.l.b16 %v632
  %v896 = vunpack.c.l.b16 %v633
  %v897 = vunpack.c.l.b16 %v634
  %v898 = vunpack.c.l.b16 %v635
  %v899 = vunpack.c.l.b16 %v636
  %v900 = vunpack.c.l.b16 %v637
  %v901 = vunpack.c.l.b16 %v638
  %v902 = vunpack.c.l.b16 %v639
  %v903 = vunpack.c.l.b16 %v640
  %v904 = vunpack.c.l.b16 %v641
  %v905 = vunpack.c.l.b16 %v642
  %v906 = vunpack.c.l.b16 %v643
  %v907 = vunpack.c.l.b16 %v644
  %v908 = vunpack.c.l.b16 %v645
  %v909 = vunpack.c.l.b16 %v646
  %v910 = vunpack.c.l.b16 %v647
  %v911 = vunpack.c.l.b16 %v648
  %v912 = vunpack.c.l.b16 %v649
  %v913 = vunpack.c.l.b16 %v650
  %v914 = vunpack.c.l.b16 %v651
  %v915 = vunpack.c.l.b16 %v652
  %v916 = vunpack.c.l.b16 %v653
  %v917 = vunpack.c.l.b16 %v654
  %v918 = vunpack.c.l.b16 %v655
  %v919 = vunpack.c.l.b16 %v656
  %v920 = vunpack.c.l.b16 %v657
  %v921 = vunpack.c.l.b16 %v658
  %v922 = vunpack.c.l.b16 %v659
  %v923 = vunpack.c.l.b16 %v660
  %v924 = vunpack.c.l.b16 %v661
  %v925 = vunpack.c.l.b16 %v662
  %v926 = vunpack.c.l.b16 %v663
  %v927 = vunpack.c.l.b16 %v664
  %v928 = vunpack.c.l.b16 %v665
  %v929 = vunpack.c.l.b16 %v666
  %v930 = vunpack.c.l.b16 %v667
  %v931 = vunpack.c.l.b16 %v668
  %v932 = vunpack.c.l.b16 %v669
  %v933 = vunpack.c.l.b16 %v670
  %v934 = vunpack.c.l.b16 %v671
  %v935 = vunpack.c.l.b16 %v672
  %v936 = vunpack.c.l.b16 %v673
  %v937 = vunpack.c.l.b16 %v674
  %v938 = vunpack.c.l.b16 %v675
  %v939 = vunpack.c.l.b16 %v676
  %v940 = vunpack.c.l.b16 %v677
  %v941 = vunpack.c.l.b16 %v678
  %v942 = vunpack.c.l.b16 %v679
  %v943 = vunpack.c.l.b16 %v680
  %v944 = vunpack.c.l.b16 %v681
  %v945 = vunpack.c.l.b16 %v682
  %v946 = vunpack.c.l.b16 %v683
  %v947 = vunpack.c.l.b16 %v684
  %v948 = vunpack.c.l.b16 %v685
  %v949 = vunpack.c.l.b16 %v686
  %v950 = vunpack.c.l.b16 %v687
  %v951 = vunpack.c.l.b16 %v688
  %v952 = vunpack.c.l.b16 %v689
  %v953 = vunpack.c.l.b16 %v690
  %v954 = vunpack.c.l.b16 %v691
  %v955 = vunpack.c.l.b16 %v692
  %v956 = vunpack.c.l.b16 %v693
  %v957 = vunpack.c.l.b16 %v694
  %v958 = vunpack.c.l.b16 %v695
  %v959 = vunpack.c.l.b16 %v696
  %v960 = vunpack.c.l.b16 %v697
  %v961 = vunpack.c.l.b16 %v698
  %v962 = vunpack.c.l.b16 %v699
  %v963 = vunpack.c.l.b16 %v700
  %v964 = vunpack.c.l.b16 %v701
  %v965 = vunpack.c.l.b16 %v702
  %v966 = vunpack.c.l.b16 %v703
  %v967 = vunpack.c.l.b16 %v704
  %v968 = vunpack.c.l.b16 %v705
  %v969 = vunpack.c.l.b16 %v706
  %v970 = vunpack.c.l.b16 %v707
  %v971 = vunpack.c.l.b16 %v708
  %v972 = vunpack.c.l.b16 %v709
  %v973 = vunpack.c.l.b16 %v710
  %v974 = vunpack.c.l.b16 %v711
  %v975 = vunpack.c.l.b16 %v712
  %v976 = vunpack.c.l.b16 %v713
  %v977 = vunpack.c.l.b16 %v714
  %v978 = vunpack.c.l.b16 %v715
  %v979 = vunpack.c.l.b16 %v716
  %v980 = vpack.c.b16 %v853, %v852
  %v981 = vpack.c.b16 %v855, %v854
  %v982 = vpack.c.b16 %v857, %v856
  %v983 = vpack.c.b16 %v859, %v858
  %v984 = vpack.c.b16 %v861, %v860
  %v985 = vpack.c.b16 %v863, %v862
  %v986 = vpack.c.b16 %v865, %v864
  %v987 = vpack.c.b16 %v867, %v866
  %v988 = vpack.c.b16 %v869, %v868
  %v989 = vpack.c.b16 %v871, %v870
  %v990 = vpack.c.b16 %v873, %v872
  %v991 = vpack.c.b16 %v875, %v874
  %v992 = vpack.c.b16 %v877, %v876
  %v993 = vpack.c.b16 %v879, %v878
  %v994 = vpack.c.b16 %v881, %v880
  %v995 = vpack.c.b16 %v883, %v882
  %v996 = vpack.c.b16 %v885, %v884
  %v997 = vpack.c.b16 %v887, %v886
  %v998 = vpack.c.b16 %v889, %v888
  %v999 = vpack.c.b16 %v891, %v890
  %v1000 = vpack.c.b16 %v893, %v892
  %v1001 = vpack.c.b16 %v895, %v894
  %v1002 = vpack.c.b16 %v897, %v896
  %v1003 = vpack.c.b16 %v899, %v898
  %v1004 = vpack.c.b16 %v901, %v900
  %v1005 = vpack.c.b16 %v903, %v902
  %v1006 = vpack.c.b16 %v905, %v904
  %v1007 = vpack.c.b16 %v907, %v906
  %v1008 = vpack.c.b16 %v909, %v908
  %v1009 = vpack.c.b16 %v911, %v910
  %v1010 = vpack.c.b16 %v913, %v912
  %v1011 = vpack.c.b16 %v915, %v914
  %v1012 = vpack.c.b16 %v917, %v916
  %v1013 = vpack.c.b16 %v919, %v918
  %v1014 = vpack.c.b16 %v921, %v920
  %v1015 = vpack.c.b16 %v923, %v922
  %v1016 = vpack.c.b16 %v925, %v924
  %v1017 = vpack.c.b16 %v927, %v926
  %v1018 = vpack.c.b16 %v929, %v928
  %v1019 = vpack.c.b16 %v931, %v930
  %v1020 = vpack.c.b16 %v933, %v932
  %v1021 = vpack.c.b16 %v935, %v934
  %v1022 = vpack.c.b16 %v937, %v936
  %v1023 = vpack.c.b16 %v939, %v938
  %v1024 = vpack.c.b16 %v941, %v940
  %v1025 = vpack.c.b16 %v943, %v942
  %v1026 = vpack.c.b16 %v945, %v944
  %v1027 = vpack.c.b16 %v947, %v946
  %v1028 = vpack.c.b16 %v949, %v948
  %v1029 = vpack.c.b16 %v951, %v950
  %v1030 = vpack.c.b16 %v953, %v952
  %v1031 = vpack.c.b16 %v955, %v954
  %v1032 = vpack.c.b16 %v957, %v956
  %v1033 = vpack.c.b16 %v959, %v958
  %v1034 = vpack.c.b16 %v961, %v960
  %v1035 = vpack.c.b16 %v963, %v962
  %v1036 = vpack.c.b16 %v965, %v964
  %v1037 = vpack.c.b16 %v967, %v966
  %v1038 = vpack.c.b16 %v969, %v968
  %v1039 = vpack.c.b16 %v971, %v970
  %v1040 = vpack.c.b16 %v973, %v972
  %v1041 = vpack.c.b16 %v975, %v974
  %v1042 = vpack.c.b16 %v977, %v976
  %v1043 = vpack.c.b16 %v979, %v978
  %1108 = vmatprep.subr.bf16.mxu0 0
  %1109 = vmatpush1.bf16.msra.mxu0 %v987
  %1110 = vmatprep.subr.bf16.mxu0 0
  %1111 = vmatpush1.bf16.msra.mxu0 %v986
  %1112 = vmatprep.subr.bf16.mxu0 0
  %1113 = vmatpush1.bf16.msra.mxu0 %v985
  %1114 = vmatprep.subr.bf16.mxu0 0
  %1115 = vmatpush1.bf16.msra.mxu0 %v984
  %1116 = vmatprep.subr.bf16.mxu0 0
  %1117 = vmatpush1.bf16.msra.mxu0 %v983
  %1118 = vmatprep.subr.bf16.mxu0 0
  %1119 = vmatpush1.bf16.msra.mxu0 %v982
  %1120 = vmatprep.subr.bf16.mxu0 0
  %1121 = vmatpush1.bf16.msra.mxu0 %v981
  %1122 = vmatprep.subr.bf16.mxu0 0
  %1123 = vmatpush1.bf16.msra.mxu0 %v980
  %1124 = vmatprep.subr.bf16.mxu0 0
  %1125 = vmatpush2.bf16.msra.mxu0 %v995
  %1126 = vmatprep.subr.bf16.mxu0 0
  %1127 = vmatpush2.bf16.msra.mxu0 %v994
  %1128 = vmatprep.subr.bf16.mxu0 0
  %1129 = vmatpush2.bf16.msra.mxu0 %v993
  %1130 = vmatprep.subr.bf16.mxu0 0
  %1131 = vmatpush2.bf16.msra.mxu0 %v992
  %1132 = vmatprep.subr.bf16.mxu0 0
  %1133 = vmatpush2.bf16.msra.mxu0 %v991
  %1134 = vmatprep.subr.bf16.mxu0 0
  %1135 = vmatpush2.bf16.msra.mxu0 %v990
  %1136 = vmatprep.subr.bf16.mxu0 0
  %1137 = vmatpush2.bf16.msra.mxu0 %v989
  %1138 = vmatprep.subr.bf16.mxu0 0
  %1139 = vmatpush2.bf16.msra.mxu0 %v988
  %1140 = vmatprep.mubr.bf16.mxu0 %v582
  %1141 = vmatmul.mubr.bf16.gmra.mxu0 %v581
  %v1142 = vpop.f32.mrf.mxu0
  %v1143 = vadd.f32 %v722, %v1142
  %v1144 = vpop.f32.mrf.mxu0
  %v1145 = vpop.f32.mrf.mxu0
  %v1146 = vadd.f32 %v722, %v1145
  %v1147 = vpop.f32.mrf.mxu0
  %1148 = vdwg.mxu0
  %1149 = vmatprep.subr.bf16.mxu0 0
  %1150 = vmatpush1.bf16.msra.mxu0 %v1003
  %1151 = vmatprep.subr.bf16.mxu0 0
  %1152 = vmatpush1.bf16.msra.mxu0 %v1002
  %1153 = vmatprep.subr.bf16.mxu0 0
  %1154 = vmatpush1.bf16.msra.mxu0 %v1001
  %1155 = vmatprep.subr.bf16.mxu0 0
  %1156 = vmatpush1.bf16.msra.mxu0 %v1000
  %1157 = vmatprep.subr.bf16.mxu0 0
  %1158 = vmatpush1.bf16.msra.mxu0 %v999
  %1159 = vmatprep.subr.bf16.mxu0 0
  %1160 = vmatpush1.bf16.msra.mxu0 %v998
  %1161 = vmatprep.subr.bf16.mxu0 0
  %1162 = vmatpush1.bf16.msra.mxu0 %v997
  %1163 = vmatprep.subr.bf16.mxu0 0
  %1164 = vmatpush1.bf16.msra.mxu0 %v996
  %1165 = vmatprep.subr.bf16.mxu0 0
  %1166 = vmatpush2.bf16.msra.mxu0 %v1011
  %1167 = vmatprep.subr.bf16.mxu0 0
  %1168 = vmatpush2.bf16.msra.mxu0 %v1010
  %1169 = vmatprep.subr.bf16.mxu0 0
  %1170 = vmatpush2.bf16.msra.mxu0 %v1009
  %1171 = vmatprep.subr.bf16.mxu0 0
  %1172 = vmatpush2.bf16.msra.mxu0 %v1008
  %1173 = vmatprep.subr.bf16.mxu0 0
  %1174 = vmatpush2.bf16.msra.mxu0 %v1007
  %1175 = vmatprep.subr.bf16.mxu0 0
  %1176 = vmatpush2.bf16.msra.mxu0 %v1006
  %1177 = vmatprep.subr.bf16.mxu0 0
  %1178 = vmatpush2.bf16.msra.mxu0 %v1005
  %1179 = vmatprep.subr.bf16.mxu0 0
  %1180 = vmatpush2.bf16.msra.mxu0 %v1004
  %1181 = vmatprep.mubr.bf16.mxu0 %v584
  %1182 = vmatmul.mubr.bf16.gmra.mxu0 %v583
  %v1183 = vpop.f32.mrf.mxu0
  %v1184 = vadd.f32 %v1143, %v1183
  %v1185 = vpop.f32.mrf.mxu0
  %v1186 = vpop.f32.mrf.mxu0
  %v1187 = vadd.f32 %v1146, %v1186
  %v1188 = vpop.f32.mrf.mxu0
  %1189 = vdwg.mxu0
  %1190 = vmatprep.subr.bf16.mxu0 0
  %1191 = vmatpush1.bf16.msra.mxu0 %v1019
  %1192 = vmatprep.subr.bf16.mxu0 0
  %1193 = vmatpush1.bf16.msra.mxu0 %v1018
  %1194 = vmatprep.subr.bf16.mxu0 0
  %1195 = vmatpush1.bf16.msra.mxu0 %v1017
  %1196 = vmatprep.subr.bf16.mxu0 0
  %1197 = vmatpush1.bf16.msra.mxu0 %v1016
  %1198 = vmatprep.subr.bf16.mxu0 0
  %1199 = vmatpush1.bf16.msra.mxu0 %v1015
  %1200 = vmatprep.subr.bf16.mxu0 0
  %1201 = vmatpush1.bf16.msra.mxu0 %v1014
  %1202 = vmatprep.subr.bf16.mxu0 0
  %1203 = vmatpush1.bf16.msra.mxu0 %v1013
  %1204 = vmatprep.subr.bf16.mxu0 0
  %1205 = vmatpush1.bf16.msra.mxu0 %v1012
  %1206 = vmatprep.subr.bf16.mxu0 0
  %1207 = vmatpush2.bf16.msra.mxu0 %v1027
  %1208 = vmatprep.subr.bf16.mxu0 0
  %1209 = vmatpush2.bf16.msra.mxu0 %v1026
  %1210 = vmatprep.subr.bf16.mxu0 0
  %1211 = vmatpush2.bf16.msra.mxu0 %v1025
  %1212 = vmatprep.subr.bf16.mxu0 0
  %1213 = vmatpush2.bf16.msra.mxu0 %v1024
  %1214 = vmatprep.subr.bf16.mxu0 0
  %1215 = vmatpush2.bf16.msra.mxu0 %v1023
  %1216 = vmatprep.subr.bf16.mxu0 0
  %1217 = vmatpush2.bf16.msra.mxu0 %v1022
  %1218 = vmatprep.subr.bf16.mxu0 0
  %1219 = vmatpush2.bf16.msra.mxu0 %v1021
  %1220 = vmatprep.subr.bf16.mxu0 0
  %1221 = vmatpush2.bf16.msra.mxu0 %v1020
  %1222 = vmatprep.mubr.bf16.mxu0 %v586
  %1223 = vmatmul.mubr.bf16.gmra.mxu0 %v585
  %v1224 = vpop.f32.mrf.mxu0
  %v1225 = vadd.f32 %v1184, %v1224
  %v1226 = vpop.f32.mrf.mxu0
  %v1227 = vpop.f32.mrf.mxu0
  %v1228 = vadd.f32 %v1187, %v1227
  %v1229 = vpop.f32.mrf.mxu0
  %1230 = vdwg.mxu0
  %1231 = vmatprep.subr.bf16.mxu0 0
  %1232 = vmatpush1.bf16.msra.mxu0 %v1035
  %1233 = vmatprep.subr.bf16.mxu0 0
  %1234 = vmatpush1.bf16.msra.mxu0 %v1034
  %1235 = vmatprep.subr.bf16.mxu0 0
  %1236 = vmatpush1.bf16.msra.mxu0 %v1033
  %1237 = vmatprep.subr.bf16.mxu0 0
  %1238 = vmatpush1.bf16.msra.mxu0 %v1032
  %1239 = vmatprep.subr.bf16.mxu0 0
  %1240 = vmatpush1.bf16.msra.mxu0 %v1031
  %1241 = vmatprep.subr.bf16.mxu0 0
  %1242 = vmatpush1.bf16.msra.mxu0 %v1030
  %1243 = vmatprep.subr.bf16.mxu0 0
  %1244 = vmatpush1.bf16.msra.mxu0 %v1029
  %1245 = vmatprep.subr.bf16.mxu0 0
  %1246 = vmatpush1.bf16.msra.mxu0 %v1028
  %1247 = vmatprep.subr.bf16.mxu0 0
  %1248 = vmatpush2.bf16.msra.mxu0 %v1043
  %1249 = vmatprep.subr.bf16.mxu0 0
  %1250 = vmatpush2.bf16.msra.mxu0 %v1042
  %1251 = vmatprep.subr.bf16.mxu0 0
  %1252 = vmatpush2.bf16.msra.mxu0 %v1041
  %1253 = vmatprep.subr.bf16.mxu0 0
  %1254 = vmatpush2.bf16.msra.mxu0 %v1040
  %1255 = vmatprep.subr.bf16.mxu0 0
  %1256 = vmatpush2.bf16.msra.mxu0 %v1039
  %1257 = vmatprep.subr.bf16.mxu0 0
  %1258 = vmatpush2.bf16.msra.mxu0 %v1038
  %1259 = vmatprep.subr.bf16.mxu0 0
  %1260 = vmatpush2.bf16.msra.mxu0 %v1037
  %1261 = vmatprep.subr.bf16.mxu0 0
  %1262 = vmatpush2.bf16.msra.mxu0 %v1036
  %1263 = vmatprep.mubr.bf16.mxu0 %v588
  %1264 = vmatmul.mubr.bf16.gmra.mxu0 %v587
  %v1265 = vpop.f32.mrf.mxu0
  %v1266 = vadd.f32 %v1225, %v1265
  %v1267 = vpop.f32.mrf.mxu0
  %v1268 = vpop.f32.mrf.mxu0
  %v1269 = vadd.f32 %v1228, %v1268
  %v1270 = vpop.f32.mrf.mxu0
  %1271 = vdwg.mxu0
  %v1272 = vpack.c.bf16 %v1269, %v1266
  %v1273 = vtanh.bf16.pop %v1272
  %v1274 = vld [vmem:[%s8] sm:$0xf]
  %v1275 = vld [vmem:[%s8 + $0x4] sm:$0xf]
  %v1276 = vld [vmem:[%s8 + $0x8] sm:$0xf]
  %v1277 = vld [vmem:[%s8 + $0xc] sm:$0xf]
  %v1278 = vld [vmem:[%s8 + $0x10] sm:$0xf]
  %v1279 = vld [vmem:[%s8 + $0x14] sm:$0xf]
  %v1280 = vld [vmem:[%s8 + $0x18] sm:$0xf]
  %v1281 = vld [vmem:[%s8 + $0x1c] sm:$0xf]
  %v1282 = vld [vmem:[%s9] sm:$0x1]
  %v1284 = vlaneseq
  %v1285 = vshrl.u32 %v1284, 7
  %v1286 = vsub.s32 0, %v1285
  %v1287 = vrot.slane %v1282, %v1286
  %v1297 = vunpack.c.l.b16 %v1274
  %v1298 = vunpack.c.l.b16 %v1275
  %v1299 = vunpack.c.l.b16 %v1276
  %v1300 = vunpack.c.l.b16 %v1277
  %v1301 = vunpack.c.l.b16 %v1278
  %v1302 = vunpack.c.l.b16 %v1279
  %v1303 = vunpack.c.l.b16 %v1280
  %v1304 = vunpack.c.l.b16 %v1281
  %v1305 = vpack.c.b16 %v1298, %v1297
  %v1306 = vpack.c.b16 %v1300, %v1299
  %v1307 = vpack.c.b16 %v1302, %v1301
  %v1308 = vpack.c.b16 %v1304, %v1303
  %v1314 = vsel %vm397, %v1273, 0
  %1316 = vmatprep.subr.bf16.mxu0 0
  %1317 = vmatpush1.bf16.msra.mxu0 0
  %1318 = vmatprep.subr.bf16.mxu0 0
  %1319 = vmatpush1.bf16.msra.mxu0 0
  %1320 = vmatprep.subr.bf16.mxu0 0
  %1321 = vmatpush1.bf16.msra.mxu0 0
  %1322 = vmatprep.subr.bf16.mxu0 0
  %1323 = vmatpush1.bf16.msra.mxu0 0
  %1324 = vmatprep.subr.bf16.mxu0 0
  %1325 = vmatpush1.bf16.msra.mxu0 %v1308
  %1326 = vmatprep.subr.bf16.mxu0 0
  %1327 = vmatpush1.bf16.msra.mxu0 %v1307
  %1328 = vmatprep.subr.bf16.mxu0 0
  %1329 = vmatpush1.bf16.msra.mxu0 %v1306
  %1330 = vmatprep.subr.bf16.mxu0 0
  %1331 = vmatpush1.bf16.msra.mxu0 %v1305
  %1332 = vmatprep.subr.bf16.mxu0 0
  %1333 = vmatpush2.bf16.msra.mxu0 0
  %1334 = vmatprep.subr.bf16.mxu0 0
  %1335 = vmatpush2.bf16.msra.mxu0 0
  %1336 = vmatprep.subr.bf16.mxu0 0
  %1337 = vmatpush2.bf16.msra.mxu0 0
  %1338 = vmatprep.subr.bf16.mxu0 0
  %1339 = vmatpush2.bf16.msra.mxu0 0
  %1340 = vmatprep.subr.bf16.mxu0 0
  %1341 = vmatpush2.bf16.msra.mxu0 0
  %1342 = vmatprep.subr.bf16.mxu0 0
  %1343 = vmatpush2.bf16.msra.mxu0 0
  %1344 = vmatprep.subr.bf16.mxu0 0
  %1345 = vmatpush2.bf16.msra.mxu0 0
  %1346 = vmatprep.subr.bf16.mxu0 0
  %1347 = vmatpush2.bf16.msra.mxu0 0
  %1348 = vmatprep.mubr.bf16.mxu0 0
  %1349 = vmatmul.mubr.bf16.gmra.mxu0 %v1314
  %v1350 = vpop.f32.mrf.mxu0
  %v1351 = vadd.f32 %v1287, %v1350
  %v1352 = vpop.f32.mrf.mxu0
  %v1353 = vpop.f32.mrf.mxu0
  %v1354 = vadd.f32 %v1287, %v1353
  %v1355 = vpop.f32.mrf.mxu0
  %1356 = vdwg.mxu0
  %v1357 = vpack.c.bf16 %v1354, %v1351
  %v1358 = vtanh.bf16.pop %v1357
  %v1359 = vld [vmem:[%s10] sm:$0xf]
  %v1360 = vld [vmem:[%s10 + $0x4] sm:$0xf]
  %v1361 = vld [vmem:[%s10 + $0x8] sm:$0xf]
  %v1362 = vld [vmem:[%s10 + $0xc] sm:$0xf]
  %v1363 = vld [vmem:[%s10 + $0x10] sm:$0xf]
  %v1364 = vld [vmem:[%s10 + $0x14] sm:$0xf]
  %v1365 = vld [vmem:[%s10 + $0x18] sm:$0xf]
  %v1366 = vld [vmem:[%s10 + $0x1c] sm:$0xf]
  %v1367 = vld [vmem:[%s11] sm:$0x1]
  %v1369 = vlaneseq
  %v1370 = vshrl.u32 %v1369, 7
  %v1371 = vsub.s32 0, %v1370
  %v1372 = vrot.slane %v1367, %v1371
  %v1382 = vunpack.c.l.b16 %v1359
  %v1383 = vunpack.c.l.b16 %v1360
  %v1384 = vunpack.c.l.b16 %v1361
  %v1385 = vunpack.c.l.b16 %v1362
  %v1386 = vunpack.c.l.b16 %v1363
  %v1387 = vunpack.c.l.b16 %v1364
  %v1388 = vunpack.c.l.b16 %v1365
  %v1389 = vunpack.c.l.b16 %v1366
  %v1390 = vpack.c.b16 %v1383, %v1382
  %v1391 = vpack.c.b16 %v1385, %v1384
  %v1392 = vpack.c.b16 %v1387, %v1386
  %v1393 = vpack.c.b16 %v1389, %v1388
  %v1399 = vsel %vm397, %v1358, 0
  %1401 = vmatprep.subr.bf16.mxu0 0
  %1402 = vmatpush1.bf16.msra.mxu0 0
  %1403 = vmatprep.subr.bf16.mxu0 0
  %1404 = vmatpush1.bf16.msra.mxu0 0
  %1405 = vmatprep.subr.bf16.mxu0 0
  %1406 = vmatpush1.bf16.msra.mxu0 0
  %1407 = vmatprep.subr.bf16.mxu0 0
  %1408 = vmatpush1.bf16.msra.mxu0 0
  %1409 = vmatprep.subr.bf16.mxu0 0
  %1410 = vmatpush1.bf16.msra.mxu0 %v1393
  %1411 = vmatprep.subr.bf16.mxu0 0
  %1412 = vmatpush1.bf16.msra.mxu0 %v1392
  %1413 = vmatprep.subr.bf16.mxu0 0
  %1414 = vmatpush1.bf16.msra.mxu0 %v1391
  %1415 = vmatprep.subr.bf16.mxu0 0
  %1416 = vmatpush1.bf16.msra.mxu0 %v1390
  %1417 = vmatprep.subr.bf16.mxu0 0
  %1418 = vmatpush2.bf16.msra.mxu0 0
  %1419 = vmatprep.subr.bf16.mxu0 0
  %1420 = vmatpush2.bf16.msra.mxu0 0
  %1421 = vmatprep.subr.bf16.mxu0 0
  %1422 = vmatpush2.bf16.msra.mxu0 0
  %1423 = vmatprep.subr.bf16.mxu0 0
  %1424 = vmatpush2.bf16.msra.mxu0 0
  %1425 = vmatprep.subr.bf16.mxu0 0
  %1426 = vmatpush2.bf16.msra.mxu0 0
  %1427 = vmatprep.subr.bf16.mxu0 0
  %1428 = vmatpush2.bf16.msra.mxu0 0
  %1429 = vmatprep.subr.bf16.mxu0 0
  %1430 = vmatpush2.bf16.msra.mxu0 0
  %1431 = vmatprep.subr.bf16.mxu0 0
  %1432 = vmatpush2.bf16.msra.mxu0 0
  %1433 = vmatprep.mubr.bf16.mxu0 0
  %1434 = vmatmul.mubr.bf16.gmra.mxu0 %v1399
  %v1435 = vpop.f32.mrf.mxu0
  %v1436 = vadd.f32 %v1372, %v1435
  %v1437 = vpop.f32.mrf.mxu0
  %v1438 = vpop.f32.mrf.mxu0
  %v1439 = vadd.f32 %v1372, %v1438
  %v1440 = vpop.f32.mrf.mxu0
  %1441 = vdwg.mxu0
  %v1442 = vpack.c.bf16 %v1439, %v1436
  %v1443 = vtanh.bf16.pop %v1442
  %v1444 = vld [vmem:[%s12] sm:$0xf]
  %v1445 = vld [vmem:[%s12 + $0x4] sm:$0xf]
  %v1446 = vld [vmem:[%s12 + $0x8] sm:$0xf]
  %v1447 = vld [vmem:[%s12 + $0xc] sm:$0xf]
  %v1448 = vld [vmem:[%s12 + $0x10] sm:$0xf]
  %v1449 = vld [vmem:[%s12 + $0x14] sm:$0xf]
  %v1450 = vld [vmem:[%s12 + $0x18] sm:$0xf]
  %v1451 = vld [vmem:[%s12 + $0x1c] sm:$0xf]
  %v1452 = vld [vmem:[%s13] sm:$0x1]
  %v1454 = vlaneseq
  %v1455 = vshrl.u32 %v1454, 7
  %v1456 = vsub.s32 0, %v1455
  %v1457 = vrot.slane %v1452, %v1456
  %v1467 = vunpack.c.l.b16 %v1444
  %v1468 = vunpack.c.l.b16 %v1445
  %v1469 = vunpack.c.l.b16 %v1446
  %v1470 = vunpack.c.l.b16 %v1447
  %v1471 = vunpack.c.l.b16 %v1448
  %v1472 = vunpack.c.l.b16 %v1449
  %v1473 = vunpack.c.l.b16 %v1450
  %v1474 = vunpack.c.l.b16 %v1451
  %v1475 = vpack.c.b16 %v1468, %v1467
  %v1476 = vpack.c.b16 %v1470, %v1469
  %v1477 = vpack.c.b16 %v1472, %v1471
  %v1478 = vpack.c.b16 %v1474, %v1473
  %v1484 = vsel %vm397, %v1443, 0
  %1486 = vmatprep.subr.bf16.mxu0 0
  %1487 = vmatpush1.bf16.msra.mxu0 0
  %1488 = vmatprep.subr.bf16.mxu0 0
  %1489 = vmatpush1.bf16.msra.mxu0 0
  %1490 = vmatprep.subr.bf16.mxu0 0
  %1491 = vmatpush1.bf16.msra.mxu0 0
  %1492 = vmatprep.subr.bf16.mxu0 0
  %1493 = vmatpush1.bf16.msra.mxu0 0
  %1494 = vmatprep.subr.bf16.mxu0 0
  %1495 = vmatpush1.bf16.msra.mxu0 %v1478
  %1496 = vmatprep.subr.bf16.mxu0 0
  %1497 = vmatpush1.bf16.msra.mxu0 %v1477
  %1498 = vmatprep.subr.bf16.mxu0 0
  %1499 = vmatpush1.bf16.msra.mxu0 %v1476
  %1500 = vmatprep.subr.bf16.mxu0 0
  %1501 = vmatpush1.bf16.msra.mxu0 %v1475
  %1502 = vmatprep.subr.bf16.mxu0 0
  %1503 = vmatpush2.bf16.msra.mxu0 0
  %1504 = vmatprep.subr.bf16.mxu0 0
  %1505 = vmatpush2.bf16.msra.mxu0 0
  %1506 = vmatprep.subr.bf16.mxu0 0
  %1507 = vmatpush2.bf16.msra.mxu0 0
  %1508 = vmatprep.subr.bf16.mxu0 0
  %1509 = vmatpush2.bf16.msra.mxu0 0
  %1510 = vmatprep.subr.bf16.mxu0 0
  %1511 = vmatpush2.bf16.msra.mxu0 0
  %1512 = vmatprep.subr.bf16.mxu0 0
  %1513 = vmatpush2.bf16.msra.mxu0 0
  %1514 = vmatprep.subr.bf16.mxu0 0
  %1515 = vmatpush2.bf16.msra.mxu0 0
  %1516 = vmatprep.subr.bf16.mxu0 0
  %1517 = vmatpush2.bf16.msra.mxu0 0
  %1518 = vmatprep.mubr.bf16.mxu0 0
  %1519 = vmatmul.mubr.bf16.gmra.mxu0 %v1484
  %v1520 = vpop.f32.mrf.mxu0
  %v1521 = vadd.f32 %v1457, %v1520
  %v1522 = vpop.f32.mrf.mxu0
  %v1523 = vpop.f32.mrf.mxu0
  %v1524 = vadd.f32 %v1457, %v1523
  %v1525 = vpop.f32.mrf.mxu0
  %1526 = vdwg.mxu0
  %v1527 = vtanh.pop %v1521
  %v1528 = vtanh.pop %v1524
  %1529 = vst.msk [vmem:[%s14] sm:$0xff] %vm397, %v1527
  %1530 = vst.msk [vmem:[%s14 + $0x8] sm:$0xff] %vm397, %v1528
  // Predicated region
  $region58: #{client_leakyrelu_net5_census.1} parent=0 // pred_check
    _
  $region59: #{client_leakyrelu_net5_census.1} parent=0 // pred_check_branch
    %1532 = sbr.rel (0) target = $region61
  $region60: #{client_leakyrelu_net5_census.1} parent=0 // pred_region
    _
  $region61: #{client_leakyrelu_net5_census.1} parent=0 // pred_fallthru
    _
  // Predicated region
  $region62: #{client_leakyrelu_net5_census.1} parent=0 // pred_check
    _
  $region63: #{client_leakyrelu_net5_census.1} parent=0 // pred_check_branch
    %1534 = sbr.rel (0) target = $region65
  $region64: #{client_leakyrelu_net5_census.1} parent=0 // pred_region
    _
  $region65: #{client_leakyrelu_net5_census.1} parent=0 // pred_fallthru
    _

</llo_original>
